<compile_context>
chip_gen: v7x
topology: tpu7x:2x2x1
jax: 0.10.0
libtpu: 0.0.40
codegen_flags: <defaults>
</compile_context>

<pallas_src>
from functools import partial

import jax
import jax.numpy as jnp
from jax import lax
from jax.experimental import pallas as pl
from jax.experimental.pallas import tpu as pltpu


def _round_up(a, b):
    return (a + b - 1) // b * b


def _cdiv(a, b):
    return -(-a // b)


def _vmem_cap():
    """Scoped-VMEM ceiling: 3/4 of physical (48 MiB on v7x, 96 MiB on v5e/v6e)."""
    try:
        phys = int(pltpu.get_tpu_info().vmem_capacity_bytes)
    except Exception:
        phys = 128 << 20
    return max(32 << 20, (phys * 3) // 4)


# ----------------------------------------------------------------------------
# Fused Bottleneck kernel (one grid step == one batch element, everything in
# VMEM between the three convs).
# ----------------------------------------------------------------------------
def _bottleneck_kernel(*refs, stride, wps, lout, sc_start, has_proj):
    if has_proj:
        (xp_ref, mask_ref, w1_ref, b1_ref, w2_ref, b2_ref, w3_ref, b3_ref,
         ws_ref, bs_ref, o_ref, z1s_ref) = refs
    else:
        (xp_ref, mask_ref, w1_ref, b1_ref, w2_ref, b2_ref, w3_ref, b3_ref,
         o_ref, z1s_ref) = refs
        ws_ref = bs_ref = None

    s = stride
    planes = w1_ref.shape[1]
    c4 = w3_ref.shape[1]

    # ---- conv1 (1x1) + bn1 + relu on the padded / phase-split grid.
    # mask==0 at positions that correspond to conv2's zero padding (otherwise
    # relu(bias1) would leak into the 3x3 taps).
    for ph in range(s):
        for pw in range(s):
            a = jnp.dot(xp_ref[0, ph, pw], w1_ref[...],
                        preferred_element_type=jnp.float32)
            a = jnp.maximum(a + b1_ref[...], 0.0) * mask_ref[ph, pw]
            z1s_ref[ph, pw] = a.astype(z1s_ref.dtype)

    # ---- conv2 (3x3, stride s, pad 1) + bn2 + relu: 9 accumulated MXU taps,
    # each a contiguous slice of the VMEM-resident conv1 output (no im2col).
    acc = jnp.zeros((lout, planes), jnp.float32)
    if s == 1:
        # Hoist the sublane-unaligned kw shift out of the kh loop: 3 shifted
        # slabs (kw=0 is free) and all kh slices are Wps-aligned.
        span = 2 * wps + lout
        for kw in range(3):
            slab = z1s_ref[0, 0, kw:kw + span, :]
            for kh in range(3):
                tap = slab[kh * wps:kh * wps + lout, :]
                acc = acc + jnp.dot(tap, w2_ref[kh, kw],
                                    preferred_element_type=jnp.float32)
    else:
        for kh in range(3):
            for kw in range(3):
                start = (kh // s) * wps + (kw // s)
                tap = z1s_ref[kh % s, kw % s, start:start + lout, :]
                acc = acc + jnp.dot(tap, w2_ref[kh, kw],
                                    preferred_element_type=jnp.float32)
    z2 = jnp.maximum(acc + b2_ref[...], 0.0).astype(jnp.bfloat16)

    # ---- conv3 (1x1) + bn3 + shortcut + final relu, all in VMEM.
    y = jnp.dot(z2, w3_ref[...], preferred_element_type=jnp.float32) + b3_ref[...]
    # The strided 1x1 shortcut samples x at (ho*s, wo*s); in the phase-split
    # flattened layout that is one contiguous slice of the input block.
    x_sc = xp_ref[0, 1 % s, 1 % s, sc_start:sc_start + lout, :]
    if has_proj:
        res = jnp.dot(x_sc, ws_ref[...],
                      preferred_element_type=jnp.float32) + bs_ref[...]
    else:
        res = x_sc.astype(jnp.float32)
    out = jnp.maximum(y + res, 0.0)

    # ---- drop the junk columns (Wps > Wo) while storing -> dense HBM output.
    ho = o_ref.shape[1]
    wo = o_ref.shape[2]
    o_ref[0] = out.reshape(ho, wps, c4)[:, :wo, :].astype(o_ref.dtype)


# ----------------------------------------------------------------------------
# Wrapper: builds the padded / phase-split input layout and launches the
# fused kernel with a batch grid.
# ----------------------------------------------------------------------------
def _conv2_pad_mask(H, W, stride, Hps, Wps):
    """mask[ph, pw, hp*Wps+wp, 0] == 1 iff that position maps to a real pixel."""
    s = stride
    r = jnp.arange(s * Hps)
    c = jnp.arange(s * Wps)
    valid = (((r >= 1) & (r <= H))[:, None]
             & ((c >= 1) & (c <= W))[None, :]).astype(jnp.float32)
    m = valid.reshape(Hps, s, Wps, s).transpose(1, 3, 0, 2)
    return m.reshape(s, s, Hps * Wps, 1)


def bottleneck_forward(x, q, stride):
    """x: (N, H, W, Cin) f32 NHWC -> (N, Ho, Wo, 4*planes) f32."""
    N, H, W, Cin = x.shape
    s = stride
    assert s in (1, 2), "ResNet Bottleneck only uses stride 1 or 2"
    planes = q["w1"].shape[1]
    c4 = q["w3"].shape[1]
    has_proj = "ws" in q
    if not has_proj:
        assert s == 1 and Cin == c4, "identity shortcut requires s=1, Cin==4*planes"

    Ho = (H - 1) // s + 1
    Wo = (W - 1) // s + 1
    # Padded per-phase width, rounded to a sublane multiple so the kh slices
    # and the conv1 GEMM stay aligned.  Hps carries the flat-slice slack rows
    # (valid for s in {1, 2}; asserted above).
    Wps = _round_up(_cdiv(W + 2, s), 8)
    Hps = max(_cdiv(H + 2, s), Ho + (2 // s) + 1)
    Sflat = Hps * Wps
    Lout = Ho * Wps                      # output rows incl. (Wps - Wo) junk cols
    sc_start = (1 // s) * (Wps + 1)      # shortcut slice offset (s=1: Wps+1, s=2: 0)

    xb = x.astype(jnp.bfloat16)
    zp = jnp.pad(xb, ((0, 0), (1, s * Hps - H - 1), (1, s * Wps - W - 1), (0, 0)))
    if s == 1:
        xp = zp.reshape(N, 1, 1, Sflat, Cin)         # pad only; free flatten
    else:
        # TODO(synk): fold this stride-phase split into the kernel (in-VMEM
        # gather) to save one HBM pass over x on stride-2 transition blocks.
        xp = zp.reshape(N, Hps, s, Wps, s, Cin).transpose(0, 2, 4, 1, 3, 5)
        xp = xp.reshape(N, s, s, Sflat, Cin)

    mask = _conv2_pad_mask(H, W, s, Hps, Wps)

    in_specs = [
        pl.BlockSpec((1, s, s, Sflat, Cin), lambda n: (n, 0, 0, 0, 0)),
        pl.BlockSpec((s, s, Sflat, 1), lambda n: (0, 0, 0, 0)),
        pl.BlockSpec((Cin, planes), lambda n: (0, 0)),
        pl.BlockSpec((1, planes), lambda n: (0, 0)),
        pl.BlockSpec((3, 3, planes, planes), lambda n: (0, 0, 0, 0)),
        pl.BlockSpec((1, planes), lambda n: (0, 0)),
        pl.BlockSpec((planes, c4), lambda n: (0, 0)),
        pl.BlockSpec((1, c4), lambda n: (0, 0)),
    ]
    args = [xp, mask,
            q["w1"], q["b1"].reshape(1, -1).astype(jnp.float32),
            q["w2"], q["b2"].reshape(1, -1).astype(jnp.float32),
            q["w3"], q["b3"].reshape(1, -1).astype(jnp.float32)]
    if has_proj:
        in_specs += [pl.BlockSpec((Cin, c4), lambda n: (0, 0)),
                     pl.BlockSpec((1, c4), lambda n: (0, 0))]
        args += [q["ws"], q["bs"].reshape(1, -1).astype(jnp.float32)]

    flops = 2 * N * (s * s * Sflat * Cin * planes       # conv1
                     + 9 * Lout * planes * planes       # conv2
                     + Lout * planes * c4)               # conv3
    if has_proj:
        flops += 2 * N * Lout * Cin * c4
    bytes_in = sum(int(a.size * a.dtype.itemsize) for a in args)
    bytes_out = N * Ho * Wo * c4 * 4

    kernel = partial(_bottleneck_kernel, stride=s, wps=Wps, lout=Lout,
                     sc_start=sc_start, has_proj=has_proj)
    out = pl.pallas_call(
        kernel,
        out_shape=jax.ShapeDtypeStruct((N, Ho, Wo, c4), jnp.float32),
        grid=(N,),
        in_specs=in_specs,
        out_specs=pl.BlockSpec((1, Ho, Wo, c4), lambda n: (n, 0, 0, 0)),
        scratch_shapes=[pltpu.VMEM((s, s, Sflat, planes), jnp.bfloat16)],
        compiler_params=pltpu.CompilerParams(
            dimension_semantics=("parallel",),
            vmem_limit_bytes=_vmem_cap()),
        cost_estimate=pl.CostEstimate(
            flops=int(flops), transcendentals=0,
            bytes_accessed=int(bytes_in + bytes_out)),
    )(*args)
    return out


# ----------------------------------------------------------------------------
# Parameters (eval-mode BatchNorm folded into per-channel scale / bias)
# ----------------------------------------------------------------------------
def fold_bn(gamma, beta, mean, var, eps=1e-5):
    scale = gamma / jnp.sqrt(var + eps)
    return scale, beta - mean * scale


def init_params(key, in_planes, planes, stride, expansion=4):
    ks = jax.random.split(key, 8)
    out3 = expansion * planes

    def conv_w(k, shape):                    # torch layout (Cout, Cin, kh, kw)
        return 0.1 * jax.random.normal(k, shape, jnp.float32)

    def bn(k, c):
        k1, k2, k3, k4 = jax.random.split(k, 4)
        gamma = 1.0 + 0.1 * jax.random.normal(k1, (c,), jnp.float32)
        beta = 0.1 * jax.random.normal(k2, (c,), jnp.float32)
        mean = 0.1 * jax.random.normal(k3, (c,), jnp.float32)
        var = jax.nn.softplus(jax.random.normal(k4, (c,), jnp.float32)) + 0.5
        return fold_bn(gamma, beta, mean, var)

    p = {"w1_oihw": conv_w(ks[0], (planes, in_planes, 1, 1)),
         "w2_oihw": conv_w(ks[2], (planes, planes, 3, 3)),
         "w3_oihw": conv_w(ks[4], (out3, planes, 1, 1))}
    p["s1"], p["b1"] = bn(ks[1], planes)
    p["s2"], p["b2"] = bn(ks[3], planes)
    p["s3"], p["b3"] = bn(ks[5], out3)
    p["has_shortcut"] = (stride != 1) or (in_planes != out3)
    if p["has_shortcut"]:
        p["ws_oihw"] = conv_w(ks[6], (out3, in_planes, 1, 1))
        p["ss"], p["bs"] = bn(ks[7], out3)
    return p


def prepare_params(p):
    """Fold the BN scale into mm-layout weights and cast them to bf16."""
    def w1x1(w_oihw, scale):                 # (Cout, Cin, 1, 1) -> (Cin, Cout)
        w = jnp.transpose(w_oihw[:, :, 0, 0], (1, 0)) * scale[None, :]
        return w.astype(jnp.bfloat16)

    q = {"w1": w1x1(p["w1_oihw"], p["s1"]), "b1": p["b1"],
         "w3": w1x1(p["w3_oihw"], p["s3"]), "b3": p["b3"], "b2": p["b2"]}
    w2 = jnp.transpose(p["w2_oihw"], (2, 3, 1, 0)) * p["s2"][None, None, None, :]
    q["w2"] = w2.astype(jnp.bfloat16)        # (kh, kw, Cin, Cout) == HWIO
    if p["has_shortcut"]:
        q["ws"] = w1x1(p["ws_oihw"], p["ss"])
        q["bs"] = p["bs"]
    return q


# ----------------------------------------------------------------------------
# Pure-lax reference using the same folded bf16 weights / dtype flow
# ----------------------------------------------------------------------------
def _conv_ref(x, w_hwio, stride, padding):
    return lax.conv_general_dilated(
        x, w_hwio, (stride, stride), padding,
        dimension_numbers=("NHWC", "HWIO", "NHWC"),
        preferred_element_type=jnp.float32)


def reference_forward(x, q, stride):
    Cin = x.shape[-1]
    planes = q["w1"].shape[1]
    out3 = q["w3"].shape[1]
    xb = x.astype(jnp.bfloat16)
    z1 = jnp.maximum(_conv_ref(xb, q["w1"].reshape(1, 1, Cin, planes), 1, "VALID")
                     + q["b1"], 0.0).astype(jnp.bfloat16)
    z2 = jnp.maximum(_conv_ref(z1, q["w2"], stride, ((1, 1), (1, 1)))
                     + q["b2"], 0.0).astype(jnp.bfloat16)
    y = _conv_ref(z2, q["w3"].reshape(1, 1, planes, out3), 1, "VALID") + q["b3"]
    if "ws" in q:
        sc = _conv_ref(xb, q["ws"].reshape(1, 1, Cin, out3), stride, "VALID") + q["bs"]
    else:
        sc = xb.astype(jnp.float32)          # same bf16 dtype flow as the kernel
    return jnp.maximum(y + sc, 0.0)


if __name__ == "__main__":
    key = jax.random.PRNGKey(0)

    # (N, H, W, in_planes, planes, stride)
    configs = [
        (2, 8, 8, 4, 4, 2),    # projection shortcut, stride 2 (== torch NCHW (2,4,8,8))
        (2, 8, 8, 16, 4, 1),   # identity shortcut, stride 1
        (1, 8, 8, 8, 4, 1),    # projection shortcut, stride 1
    ]
    for cfg in configs:
        N, H, W, in_planes, planes, stride = cfg
        kx, kp, key = jax.random.split(key, 3)
        x = jax.random.normal(kx, (N, H, W, in_planes), jnp.float32)
        params = init_params(kp, in_planes, planes, stride)
        prep = prepare_params(params)

        fwd = jax.jit(partial(bottleneck_forward, stride=stride))
        out = jax.block_until_ready(fwd(x, prep))

        ref = reference_forward(x, prep, stride)
        assert out.shape == ref.shape, (cfg, out.shape, ref.shape)
        err = float(jnp.max(jnp.abs(out - ref)))
        assert err < 1e-2, (cfg, err)

    print("KERNEL_OK")
</pallas_src>

<mosaic_0001>
module attributes {stable_mosaic.version = 11 : i64} {
  func.func @_bottleneck_kernel(%arg0: i32, %arg1: memref<1x2x2x48x4xbf16, #tpu.memory_space<vmem>>, %arg2: memref<2x2x48x1xf32, #tpu.memory_space<vmem>>, %arg3: memref<4x4xbf16, #tpu.memory_space<vmem>>, %arg4: memref<1x4xf32, #tpu.memory_space<vmem>>, %arg5: memref<3x3x4x4xbf16, #tpu.memory_space<vmem>>, %arg6: memref<1x4xf32, #tpu.memory_space<vmem>>, %arg7: memref<4x16xbf16, #tpu.memory_space<vmem>>, %arg8: memref<1x16xf32, #tpu.memory_space<vmem>>, %arg9: memref<4x16xbf16, #tpu.memory_space<vmem>>, %arg10: memref<1x16xf32, #tpu.memory_space<vmem>>, %arg11: memref<1x4x4x16xf32, #tpu.memory_space<vmem>>, %arg12: memref<2x2x48x4xbf16, #tpu.memory_space<vmem>>) attributes {dimension_semantics = [#tpu.dimension_semantics<parallel>], iteration_bounds = array<i64: 2>, scalar_prefetch = 0 : i64, scratch_operands = 1 : i64, tpu.core_type = #tpu.core_type<tc>, window_params = [{transform_indices = @transform_0, window_bounds = array<i64: 1, 2, 2, 48, 4>}, {pipeline_mode = #tpu.pipeline_mode<synchronous>, transform_indices = @transform_1, window_bounds = array<i64: 2, 2, 48, 1>}, {pipeline_mode = #tpu.pipeline_mode<synchronous>, transform_indices = @transform_2, window_bounds = array<i64: 4, 4>}, {pipeline_mode = #tpu.pipeline_mode<synchronous>, transform_indices = @transform_3, window_bounds = array<i64: 1, 4>}, {pipeline_mode = #tpu.pipeline_mode<synchronous>, transform_indices = @transform_4, window_bounds = array<i64: 3, 3, 4, 4>}, {pipeline_mode = #tpu.pipeline_mode<synchronous>, transform_indices = @transform_5, window_bounds = array<i64: 1, 4>}, {pipeline_mode = #tpu.pipeline_mode<synchronous>, transform_indices = @transform_6, window_bounds = array<i64: 4, 16>}, {pipeline_mode = #tpu.pipeline_mode<synchronous>, transform_indices = @transform_7, window_bounds = array<i64: 1, 16>}, {pipeline_mode = #tpu.pipeline_mode<synchronous>, transform_indices = @transform_8, window_bounds = array<i64: 4, 16>}, {pipeline_mode = #tpu.pipeline_mode<synchronous>, transform_indices = @transform_9, window_bounds = array<i64: 1, 16>}, {transform_indices = @transform_10, window_bounds = array<i64: 1, 4, 4, 16>}]} {
    %c0 = arith.constant 0 : index
    %c0_0 = arith.constant 0 : index
    %c0_1 = arith.constant 0 : index
    %c0_2 = arith.constant 0 : index
    %c0_3 = arith.constant 0 : index
    %0 = vector.load %arg1[%c0, %c0_0, %c0_1, %c0_2, %c0_3] : memref<1x2x2x48x4xbf16, #tpu.memory_space<vmem>>, vector<1x1x1x48x4xbf16>
    %1 = vector.shape_cast %0 : vector<1x1x1x48x4xbf16> to vector<48x4xbf16>
    %c0_4 = arith.constant 0 : index
    %c0_5 = arith.constant 0 : index
    %2 = vector.load %arg3[%c0_4, %c0_5] : memref<4x4xbf16, #tpu.memory_space<vmem>>, vector<4x4xbf16>
    %cst = arith.constant dense<0.000000e+00> : vector<48x4xf32>
    %3 = tpu.matmul %1, %2, %cst {dimension_numbers = #tpu.dot_dimension_numbers<[1], [0], [0], [1], [0, 0, 1, 1], [], []>} : vector<48x4xbf16>, vector<4x4xbf16>, vector<48x4xf32> -> vector<48x4xf32>
    %c0_6 = arith.constant 0 : index
    %c0_7 = arith.constant 0 : index
    %4 = vector.load %arg4[%c0_6, %c0_7] : memref<1x4xf32, #tpu.memory_space<vmem>>, vector<1x4xf32>
    %5 = vector.broadcast %4 : vector<1x4xf32> to vector<48x4xf32>
    %6 = arith.addf %3, %5 : vector<48x4xf32>
    %cst_8 = arith.constant 0.000000e+00 : f32
    %7 = vector.broadcast %cst_8 : f32 to vector<48x4xf32>
    %8 = arith.maximumf %6, %7 : vector<48x4xf32>
    %c0_9 = arith.constant 0 : index
    %c0_10 = arith.constant 0 : index
    %c0_11 = arith.constant 0 : index
    %c0_12 = arith.constant 0 : index
    %9 = vector.load %arg2[%c0_9, %c0_10, %c0_11, %c0_12] : memref<2x2x48x1xf32, #tpu.memory_space<vmem>>, vector<1x1x48x1xf32>
    %10 = vector.shape_cast %9 : vector<1x1x48x1xf32> to vector<48x1xf32>
    %11 = vector.broadcast %10 : vector<48x1xf32> to vector<48x4xf32>
    %12 = arith.mulf %8, %11 : vector<48x4xf32>
    %13 = arith.truncf %12 : vector<48x4xf32> to vector<48x4xbf16>
    %c0_13 = arith.constant 0 : index
    %c0_14 = arith.constant 0 : index
    %c0_15 = arith.constant 0 : index
    %c0_16 = arith.constant 0 : index
    %14 = vector.load %arg12[%c0_13, %c0_14, %c0_15, %c0_16] : memref<2x2x48x4xbf16, #tpu.memory_space<vmem>>, vector<1x1x48x4xbf16>
    %15 = vector.shape_cast %14 : vector<1x1x48x4xbf16> to vector<48x4xbf16>
    %16 = vector.shape_cast %13 : vector<48x4xbf16> to vector<1x1x48x4xbf16>
    tpu.vector_store %arg12[%c0_13, %c0_14, %c0_15, %c0_16], %16 {strides = array<i32>} : memref<2x2x48x4xbf16, #tpu.memory_space<vmem>>, vector<1x1x48x4xbf16>,
    %c0_17 = arith.constant 0 : index
    %c0_18 = arith.constant 0 : index
    %c1 = arith.constant 1 : index
    %c0_19 = arith.constant 0 : index
    %c0_20 = arith.constant 0 : index
    %17 = vector.load %arg1[%c0_17, %c0_18, %c1, %c0_19, %c0_20] : memref<1x2x2x48x4xbf16, #tpu.memory_space<vmem>>, vector<1x1x1x48x4xbf16>
    %18 = vector.shape_cast %17 : vector<1x1x1x48x4xbf16> to vector<48x4xbf16>
    %c0_21 = arith.constant 0 : index
    %c0_22 = arith.constant 0 : index
    %19 = vector.load %arg3[%c0_21, %c0_22] : memref<4x4xbf16, #tpu.memory_space<vmem>>, vector<4x4xbf16>
    %cst_23 = arith.constant dense<0.000000e+00> : vector<48x4xf32>
    %20 = tpu.matmul %18, %19, %cst_23 {dimension_numbers = #tpu.dot_dimension_numbers<[1], [0], [0], [1], [0, 0, 1, 1], [], []>} : vector<48x4xbf16>, vector<4x4xbf16>, vector<48x4xf32> -> vector<48x4xf32>
    %c0_24 = arith.constant 0 : index
    %c0_25 = arith.constant 0 : index
    %21 = vector.load %arg4[%c0_24, %c0_25] : memref<1x4xf32, #tpu.memory_space<vmem>>, vector<1x4xf32>
    %22 = vector.broadcast %21 : vector<1x4xf32> to vector<48x4xf32>
    %23 = arith.addf %20, %22 : vector<48x4xf32>
    %cst_26 = arith.constant 0.000000e+00 : f32
    %24 = vector.broadcast %cst_26 : f32 to vector<48x4xf32>
    %25 = arith.maximumf %23, %24 : vector<48x4xf32>
    %c0_27 = arith.constant 0 : index
    %c1_28 = arith.constant 1 : index
    %c0_29 = arith.constant 0 : index
    %c0_30 = arith.constant 0 : index
    %26 = vector.load %arg2[%c0_27, %c1_28, %c0_29, %c0_30] : memref<2x2x48x1xf32, #tpu.memory_space<vmem>>, vector<1x1x48x1xf32>
    %27 = vector.shape_cast %26 : vector<1x1x48x1xf32> to vector<48x1xf32>
    %28 = vector.broadcast %27 : vector<48x1xf32> to vector<48x4xf32>
    %29 = arith.mulf %25, %28 : vector<48x4xf32>
    %30 = arith.truncf %29 : vector<48x4xf32> to vector<48x4xbf16>
    %c0_31 = arith.constant 0 : index
    %c1_32 = arith.constant 1 : index
    %c0_33 = arith.constant 0 : index
    %c0_34 = arith.constant 0 : index
    %31 = vector.load %arg12[%c0_31, %c1_32, %c0_33, %c0_34] : memref<2x2x48x4xbf16, #tpu.memory_space<vmem>>, vector<1x1x48x4xbf16>
    %32 = vector.shape_cast %31 : vector<1x1x48x4xbf16> to vector<48x4xbf16>
    %33 = vector.shape_cast %30 : vector<48x4xbf16> to vector<1x1x48x4xbf16>
    tpu.vector_store %arg12[%c0_31, %c1_32, %c0_33, %c0_34], %33 {strides = array<i32>} : memref<2x2x48x4xbf16, #tpu.memory_space<vmem>>, vector<1x1x48x4xbf16>,
    %c0_35 = arith.constant 0 : index
    %c1_36 = arith.constant 1 : index
    %c0_37 = arith.constant 0 : index
    %c0_38 = arith.constant 0 : index
    %c0_39 = arith.constant 0 : index
    %34 = vector.load %arg1[%c0_35, %c1_36, %c0_37, %c0_38, %c0_39] : memref<1x2x2x48x4xbf16, #tpu.memory_space<vmem>>, vector<1x1x1x48x4xbf16>
    %35 = vector.shape_cast %34 : vector<1x1x1x48x4xbf16> to vector<48x4xbf16>
    %c0_40 = arith.constant 0 : index
    %c0_41 = arith.constant 0 : index
    %36 = vector.load %arg3[%c0_40, %c0_41] : memref<4x4xbf16, #tpu.memory_space<vmem>>, vector<4x4xbf16>
    %cst_42 = arith.constant dense<0.000000e+00> : vector<48x4xf32>
    %37 = tpu.matmul %35, %36, %cst_42 {dimension_numbers = #tpu.dot_dimension_numbers<[1], [0], [0], [1], [0, 0, 1, 1], [], []>} : vector<48x4xbf16>, vector<4x4xbf16>, vector<48x4xf32> -> vector<48x4xf32>
    %c0_43 = arith.constant 0 : index
    %c0_44 = arith.constant 0 : index
    %38 = vector.load %arg4[%c0_43, %c0_44] : memref<1x4xf32, #tpu.memory_space<vmem>>, vector<1x4xf32>
    %39 = vector.broadcast %38 : vector<1x4xf32> to vector<48x4xf32>
    %40 = arith.addf %37, %39 : vector<48x4xf32>
    %cst_45 = arith.constant 0.000000e+00 : f32
    %41 = vector.broadcast %cst_45 : f32 to vector<48x4xf32>
    %42 = arith.maximumf %40, %41 : vector<48x4xf32>
    %c1_46 = arith.constant 1 : index
    %c0_47 = arith.constant 0 : index
    %c0_48 = arith.constant 0 : index
    %c0_49 = arith.constant 0 : index
    %43 = vector.load %arg2[%c1_46, %c0_47, %c0_48, %c0_49] : memref<2x2x48x1xf32, #tpu.memory_space<vmem>>, vector<1x1x48x1xf32>
    %44 = vector.shape_cast %43 : vector<1x1x48x1xf32> to vector<48x1xf32>
    %45 = vector.broadcast %44 : vector<48x1xf32> to vector<48x4xf32>
    %46 = arith.mulf %42, %45 : vector<48x4xf32>
    %47 = arith.truncf %46 : vector<48x4xf32> to vector<48x4xbf16>
    %c1_50 = arith.constant 1 : index
    %c0_51 = arith.constant 0 : index
    %c0_52 = arith.constant 0 : index
    %c0_53 = arith.constant 0 : index
    %48 = vector.load %arg12[%c1_50, %c0_51, %c0_52, %c0_53] : memref<2x2x48x4xbf16, #tpu.memory_space<vmem>>, vector<1x1x48x4xbf16>
    %49 = vector.shape_cast %48 : vector<1x1x48x4xbf16> to vector<48x4xbf16>
    %50 = vector.shape_cast %47 : vector<48x4xbf16> to vector<1x1x48x4xbf16>
    tpu.vector_store %arg12[%c1_50, %c0_51, %c0_52, %c0_53], %50 {strides = array<i32>} : memref<2x2x48x4xbf16, #tpu.memory_space<vmem>>, vector<1x1x48x4xbf16>,
    %c0_54 = arith.constant 0 : index
    %c1_55 = arith.constant 1 : index
    %c1_56 = arith.constant 1 : index
    %c0_57 = arith.constant 0 : index
    %c0_58 = arith.constant 0 : index
    %51 = vector.load %arg1[%c0_54, %c1_55, %c1_56, %c0_57, %c0_58] : memref<1x2x2x48x4xbf16, #tpu.memory_space<vmem>>, vector<1x1x1x48x4xbf16>
    %52 = vector.shape_cast %51 : vector<1x1x1x48x4xbf16> to vector<48x4xbf16>
    %c0_59 = arith.constant 0 : index
    %c0_60 = arith.constant 0 : index
    %53 = vector.load %arg3[%c0_59, %c0_60] : memref<4x4xbf16, #tpu.memory_space<vmem>>, vector<4x4xbf16>
    %cst_61 = arith.constant dense<0.000000e+00> : vector<48x4xf32>
    %54 = tpu.matmul %52, %53, %cst_61 {dimension_numbers = #tpu.dot_dimension_numbers<[1], [0], [0], [1], [0, 0, 1, 1], [], []>} : vector<48x4xbf16>, vector<4x4xbf16>, vector<48x4xf32> -> vector<48x4xf32>
    %c0_62 = arith.constant 0 : index
    %c0_63 = arith.constant 0 : index
    %55 = vector.load %arg4[%c0_62, %c0_63] : memref<1x4xf32, #tpu.memory_space<vmem>>, vector<1x4xf32>
    %56 = vector.broadcast %55 : vector<1x4xf32> to vector<48x4xf32>
    %57 = arith.addf %54, %56 : vector<48x4xf32>
    %cst_64 = arith.constant 0.000000e+00 : f32
    %58 = vector.broadcast %cst_64 : f32 to vector<48x4xf32>
    %59 = arith.maximumf %57, %58 : vector<48x4xf32>
    %c1_65 = arith.constant 1 : index
    %c1_66 = arith.constant 1 : index
    %c0_67 = arith.constant 0 : index
    %c0_68 = arith.constant 0 : index
    %60 = vector.load %arg2[%c1_65, %c1_66, %c0_67, %c0_68] : memref<2x2x48x1xf32, #tpu.memory_space<vmem>>, vector<1x1x48x1xf32>
    %61 = vector.shape_cast %60 : vector<1x1x48x1xf32> to vector<48x1xf32>
    %62 = vector.broadcast %61 : vector<48x1xf32> to vector<48x4xf32>
    %63 = arith.mulf %59, %62 : vector<48x4xf32>
    %64 = arith.truncf %63 : vector<48x4xf32> to vector<48x4xbf16>
    %c1_69 = arith.constant 1 : index
    %c1_70 = arith.constant 1 : index
    %c0_71 = arith.constant 0 : index
    %c0_72 = arith.constant 0 : index
    %65 = vector.load %arg12[%c1_69, %c1_70, %c0_71, %c0_72] : memref<2x2x48x4xbf16, #tpu.memory_space<vmem>>, vector<1x1x48x4xbf16>
    %66 = vector.shape_cast %65 : vector<1x1x48x4xbf16> to vector<48x4xbf16>
    %67 = vector.shape_cast %64 : vector<48x4xbf16> to vector<1x1x48x4xbf16>
    tpu.vector_store %arg12[%c1_69, %c1_70, %c0_71, %c0_72], %67 {strides = array<i32>} : memref<2x2x48x4xbf16, #tpu.memory_space<vmem>>, vector<1x1x48x4xbf16>,
    %cst_73 = arith.constant 0.000000e+00 : f32
    %68 = vector.broadcast %cst_73 : f32 to vector<32x4xf32>
    %c0_74 = arith.constant 0 : index
    %c0_75 = arith.constant 0 : index
    %c0_76 = arith.constant 0 : index
    %c0_77 = arith.constant 0 : index
    %69 = vector.load %arg12[%c0_74, %c0_75, %c0_76, %c0_77] : memref<2x2x48x4xbf16, #tpu.memory_space<vmem>>, vector<1x1x32x4xbf16>
    %70 = vector.shape_cast %69 : vector<1x1x32x4xbf16> to vector<32x4xbf16>
    %c0_78 = arith.constant 0 : index
    %c0_79 = arith.constant 0 : index
    %c0_80 = arith.constant 0 : index
    %c0_81 = arith.constant 0 : index
    %71 = vector.load %arg5[%c0_78, %c0_79, %c0_80, %c0_81] : memref<3x3x4x4xbf16, #tpu.memory_space<vmem>>, vector<1x1x4x4xbf16>
    %72 = vector.shape_cast %71 : vector<1x1x4x4xbf16> to vector<4x4xbf16>
    %cst_82 = arith.constant dense<0.000000e+00> : vector<32x4xf32>
    %73 = tpu.matmul %70, %72, %cst_82 {dimension_numbers = #tpu.dot_dimension_numbers<[1], [0], [0], [1], [0, 0, 1, 1], [], []>} : vector<32x4xbf16>, vector<4x4xbf16>, vector<32x4xf32> -> vector<32x4xf32>
    %74 = arith.addf %68, %73 : vector<32x4xf32>
    %c0_83 = arith.constant 0 : index
    %c1_84 = arith.constant 1 : index
    %c0_85 = arith.constant 0 : index
    %c0_86 = arith.constant 0 : index
    %75 = vector.load %arg12[%c0_83, %c1_84, %c0_85, %c0_86] : memref<2x2x48x4xbf16, #tpu.memory_space<vmem>>, vector<1x1x32x4xbf16>
    %76 = vector.shape_cast %75 : vector<1x1x32x4xbf16> to vector<32x4xbf16>
    %c0_87 = arith.constant 0 : index
    %c1_88 = arith.constant 1 : index
    %c0_89 = arith.constant 0 : index
    %c0_90 = arith.constant 0 : index
    %77 = vector.load %arg5[%c0_87, %c1_88, %c0_89, %c0_90] : memref<3x3x4x4xbf16, #tpu.memory_space<vmem>>, vector<1x1x4x4xbf16>
    %78 = vector.shape_cast %77 : vector<1x1x4x4xbf16> to vector<4x4xbf16>
    %cst_91 = arith.constant dense<0.000000e+00> : vector<32x4xf32>
    %79 = tpu.matmul %76, %78, %cst_91 {dimension_numbers = #tpu.dot_dimension_numbers<[1], [0], [0], [1], [0, 0, 1, 1], [], []>} : vector<32x4xbf16>, vector<4x4xbf16>, vector<32x4xf32> -> vector<32x4xf32>
    %80 = arith.addf %74, %79 : vector<32x4xf32>
    %c0_92 = arith.constant 0 : index
    %c0_93 = arith.constant 0 : index
    %c1_94 = arith.constant 1 : index
    %c0_95 = arith.constant 0 : index
    %81 = vector.load %arg12[%c0_92, %c0_93, %c1_94, %c0_95] : memref<2x2x48x4xbf16, #tpu.memory_space<vmem>>, vector<1x1x32x4xbf16>
    %82 = vector.shape_cast %81 : vector<1x1x32x4xbf16> to vector<32x4xbf16>
    %c0_96 = arith.constant 0 : index
    %c2 = arith.constant 2 : index
    %c0_97 = arith.constant 0 : index
    %c0_98 = arith.constant 0 : index
    %83 = vector.load %arg5[%c0_96, %c2, %c0_97, %c0_98] : memref<3x3x4x4xbf16, #tpu.memory_space<vmem>>, vector<1x1x4x4xbf16>
    %84 = vector.shape_cast %83 : vector<1x1x4x4xbf16> to vector<4x4xbf16>
    %cst_99 = arith.constant dense<0.000000e+00> : vector<32x4xf32>
    %85 = tpu.matmul %82, %84, %cst_99 {dimension_numbers = #tpu.dot_dimension_numbers<[1], [0], [0], [1], [0, 0, 1, 1], [], []>} : vector<32x4xbf16>, vector<4x4xbf16>, vector<32x4xf32> -> vector<32x4xf32>
    %86 = arith.addf %80, %85 : vector<32x4xf32>
    %c1_100 = arith.constant 1 : index
    %c0_101 = arith.constant 0 : index
    %c0_102 = arith.constant 0 : index
    %c0_103 = arith.constant 0 : index
    %87 = vector.load %arg12[%c1_100, %c0_101, %c0_102, %c0_103] : memref<2x2x48x4xbf16, #tpu.memory_space<vmem>>, vector<1x1x32x4xbf16>
    %88 = vector.shape_cast %87 : vector<1x1x32x4xbf16> to vector<32x4xbf16>
    %c1_104 = arith.constant 1 : index
    %c0_105 = arith.constant 0 : index
    %c0_106 = arith.constant 0 : index
    %c0_107 = arith.constant 0 : index
    %89 = vector.load %arg5[%c1_104, %c0_105, %c0_106, %c0_107] : memref<3x3x4x4xbf16, #tpu.memory_space<vmem>>, vector<1x1x4x4xbf16>
    %90 = vector.shape_cast %89 : vector<1x1x4x4xbf16> to vector<4x4xbf16>
    %cst_108 = arith.constant dense<0.000000e+00> : vector<32x4xf32>
    %91 = tpu.matmul %88, %90, %cst_108 {dimension_numbers = #tpu.dot_dimension_numbers<[1], [0], [0], [1], [0, 0, 1, 1], [], []>} : vector<32x4xbf16>, vector<4x4xbf16>, vector<32x4xf32> -> vector<32x4xf32>
    %92 = arith.addf %86, %91 : vector<32x4xf32>
    %c1_109 = arith.constant 1 : index
    %c1_110 = arith.constant 1 : index
    %c0_111 = arith.constant 0 : index
    %c0_112 = arith.constant 0 : index
    %93 = vector.load %arg12[%c1_109, %c1_110, %c0_111, %c0_112] : memref<2x2x48x4xbf16, #tpu.memory_space<vmem>>, vector<1x1x32x4xbf16>
    %94 = vector.shape_cast %93 : vector<1x1x32x4xbf16> to vector<32x4xbf16>
    %c1_113 = arith.constant 1 : index
    %c1_114 = arith.constant 1 : index
    %c0_115 = arith.constant 0 : index
    %c0_116 = arith.constant 0 : index
    %95 = vector.load %arg5[%c1_113, %c1_114, %c0_115, %c0_116] : memref<3x3x4x4xbf16, #tpu.memory_space<vmem>>, vector<1x1x4x4xbf16>
    %96 = vector.shape_cast %95 : vector<1x1x4x4xbf16> to vector<4x4xbf16>
    %cst_117 = arith.constant dense<0.000000e+00> : vector<32x4xf32>
    %97 = tpu.matmul %94, %96, %cst_117 {dimension_numbers = #tpu.dot_dimension_numbers<[1], [0], [0], [1], [0, 0, 1, 1], [], []>} : vector<32x4xbf16>, vector<4x4xbf16>, vector<32x4xf32> -> vector<32x4xf32>
    %98 = arith.addf %92, %97 : vector<32x4xf32>
    %c1_118 = arith.constant 1 : index
    %c0_119 = arith.constant 0 : index
    %c1_120 = arith.constant 1 : index
    %c0_121 = arith.constant 0 : index
    %99 = vector.load %arg12[%c1_118, %c0_119, %c1_120, %c0_121] : memref<2x2x48x4xbf16, #tpu.memory_space<vmem>>, vector<1x1x32x4xbf16>
    %100 = vector.shape_cast %99 : vector<1x1x32x4xbf16> to vector<32x4xbf16>
    %c1_122 = arith.constant 1 : index
    %c2_123 = arith.constant 2 : index
    %c0_124 = arith.constant 0 : index
    %c0_125 = arith.constant 0 : index
    %101 = vector.load %arg5[%c1_122, %c2_123, %c0_124, %c0_125] : memref<3x3x4x4xbf16, #tpu.memory_space<vmem>>, vector<1x1x4x4xbf16>
    %102 = vector.shape_cast %101 : vector<1x1x4x4xbf16> to vector<4x4xbf16>
    %cst_126 = arith.constant dense<0.000000e+00> : vector<32x4xf32>
    %103 = tpu.matmul %100, %102, %cst_126 {dimension_numbers = #tpu.dot_dimension_numbers<[1], [0], [0], [1], [0, 0, 1, 1], [], []>} : vector<32x4xbf16>, vector<4x4xbf16>, vector<32x4xf32> -> vector<32x4xf32>
    %104 = arith.addf %98, %103 : vector<32x4xf32>
    %c0_127 = arith.constant 0 : index
    %c0_128 = arith.constant 0 : index
    %c8 = arith.constant 8 : index
    %c0_129 = arith.constant 0 : index
    %105 = vector.load %arg12[%c0_127, %c0_128, %c8, %c0_129] : memref<2x2x48x4xbf16, #tpu.memory_space<vmem>>, vector<1x1x32x4xbf16>
    %106 = vector.shape_cast %105 : vector<1x1x32x4xbf16> to vector<32x4xbf16>
    %c2_130 = arith.constant 2 : index
    %c0_131 = arith.constant 0 : index
    %c0_132 = arith.constant 0 : index
    %c0_133 = arith.constant 0 : index
    %107 = vector.load %arg5[%c2_130, %c0_131, %c0_132, %c0_133] : memref<3x3x4x4xbf16, #tpu.memory_space<vmem>>, vector<1x1x4x4xbf16>
    %108 = vector.shape_cast %107 : vector<1x1x4x4xbf16> to vector<4x4xbf16>
    %cst_134 = arith.constant dense<0.000000e+00> : vector<32x4xf32>
    %109 = tpu.matmul %106, %108, %cst_134 {dimension_numbers = #tpu.dot_dimension_numbers<[1], [0], [0], [1], [0, 0, 1, 1], [], []>} : vector<32x4xbf16>, vector<4x4xbf16>, vector<32x4xf32> -> vector<32x4xf32>
    %110 = arith.addf %104, %109 : vector<32x4xf32>
    %c0_135 = arith.constant 0 : index
    %c1_136 = arith.constant 1 : index
    %c8_137 = arith.constant 8 : index
    %c0_138 = arith.constant 0 : index
    %111 = vector.load %arg12[%c0_135, %c1_136, %c8_137, %c0_138] : memref<2x2x48x4xbf16, #tpu.memory_space<vmem>>, vector<1x1x32x4xbf16>
    %112 = vector.shape_cast %111 : vector<1x1x32x4xbf16> to vector<32x4xbf16>
    %c2_139 = arith.constant 2 : index
    %c1_140 = arith.constant 1 : index
    %c0_141 = arith.constant 0 : index
    %c0_142 = arith.constant 0 : index
    %113 = vector.load %arg5[%c2_139, %c1_140, %c0_141, %c0_142] : memref<3x3x4x4xbf16, #tpu.memory_space<vmem>>, vector<1x1x4x4xbf16>
    %114 = vector.shape_cast %113 : vector<1x1x4x4xbf16> to vector<4x4xbf16>
    %cst_143 = arith.constant dense<0.000000e+00> : vector<32x4xf32>
    %115 = tpu.matmul %112, %114, %cst_143 {dimension_numbers = #tpu.dot_dimension_numbers<[1], [0], [0], [1], [0, 0, 1, 1], [], []>} : vector<32x4xbf16>, vector<4x4xbf16>, vector<32x4xf32> -> vector<32x4xf32>
    %116 = arith.addf %110, %115 : vector<32x4xf32>
    %c0_144 = arith.constant 0 : index
    %c0_145 = arith.constant 0 : index
    %c9 = arith.constant 9 : index
    %c0_146 = arith.constant 0 : index
    %117 = vector.load %arg12[%c0_144, %c0_145, %c9, %c0_146] : memref<2x2x48x4xbf16, #tpu.memory_space<vmem>>, vector<1x1x32x4xbf16>
    %118 = vector.shape_cast %117 : vector<1x1x32x4xbf16> to vector<32x4xbf16>
    %c2_147 = arith.constant 2 : index
    %c2_148 = arith.constant 2 : index
    %c0_149 = arith.constant 0 : index
    %c0_150 = arith.constant 0 : index
    %119 = vector.load %arg5[%c2_147, %c2_148, %c0_149, %c0_150] : memref<3x3x4x4xbf16, #tpu.memory_space<vmem>>, vector<1x1x4x4xbf16>
    %120 = vector.shape_cast %119 : vector<1x1x4x4xbf16> to vector<4x4xbf16>
    %cst_151 = arith.constant dense<0.000000e+00> : vector<32x4xf32>
    %121 = tpu.matmul %118, %120, %cst_151 {dimension_numbers = #tpu.dot_dimension_numbers<[1], [0], [0], [1], [0, 0, 1, 1], [], []>} : vector<32x4xbf16>, vector<4x4xbf16>, vector<32x4xf32> -> vector<32x4xf32>
    %122 = arith.addf %116, %121 : vector<32x4xf32>
    %c0_152 = arith.constant 0 : index
    %c0_153 = arith.constant 0 : index
    %123 = vector.load %arg6[%c0_152, %c0_153] : memref<1x4xf32, #tpu.memory_space<vmem>>, vector<1x4xf32>
    %124 = vector.broadcast %123 : vector<1x4xf32> to vector<32x4xf32>
    %125 = arith.addf %122, %124 : vector<32x4xf32>
    %cst_154 = arith.constant 0.000000e+00 : f32
    %126 = vector.broadcast %cst_154 : f32 to vector<32x4xf32>
    %127 = arith.maximumf %125, %126 : vector<32x4xf32>
    %128 = arith.truncf %127 : vector<32x4xf32> to vector<32x4xbf16>
    %c0_155 = arith.constant 0 : index
    %c0_156 = arith.constant 0 : index
    %129 = vector.load %arg7[%c0_155, %c0_156] : memref<4x16xbf16, #tpu.memory_space<vmem>>, vector<4x16xbf16>
    %cst_157 = arith.constant dense<0.000000e+00> : vector<32x16xf32>
    %130 = tpu.matmul %128, %129, %cst_157 {dimension_numbers = #tpu.dot_dimension_numbers<[1], [0], [0], [1], [0, 0, 1, 1], [], []>} : vector<32x4xbf16>, vector<4x16xbf16>, vector<32x16xf32> -> vector<32x16xf32>
    %c0_158 = arith.constant 0 : index
    %c0_159 = arith.constant 0 : index
    %131 = vector.load %arg8[%c0_158, %c0_159] : memref<1x16xf32, #tpu.memory_space<vmem>>, vector<1x16xf32>
    %132 = vector.broadcast %131 : vector<1x16xf32> to vector<32x16xf32>
    %133 = arith.addf %130, %132 : vector<32x16xf32>
    %c0_160 = arith.constant 0 : index
    %c1_161 = arith.constant 1 : index
    %c1_162 = arith.constant 1 : index
    %c0_163 = arith.constant 0 : index
    %c0_164 = arith.constant 0 : index
    %134 = vector.load %arg1[%c0_160, %c1_161, %c1_162, %c0_163, %c0_164] : memref<1x2x2x48x4xbf16, #tpu.memory_space<vmem>>, vector<1x1x1x32x4xbf16>
    %135 = vector.shape_cast %134 : vector<1x1x1x32x4xbf16> to vector<32x4xbf16>
    %c0_165 = arith.constant 0 : index
    %c0_166 = arith.constant 0 : index
    %136 = vector.load %arg9[%c0_165, %c0_166] : memref<4x16xbf16, #tpu.memory_space<vmem>>, vector<4x16xbf16>
    %cst_167 = arith.constant dense<0.000000e+00> : vector<32x16xf32>
    %137 = tpu.matmul %135, %136, %cst_167 {dimension_numbers = #tpu.dot_dimension_numbers<[1], [0], [0], [1], [0, 0, 1, 1], [], []>} : vector<32x4xbf16>, vector<4x16xbf16>, vector<32x16xf32> -> vector<32x16xf32>
    %c0_168 = arith.constant 0 : index
    %c0_169 = arith.constant 0 : index
    %138 = vector.load %arg10[%c0_168, %c0_169] : memref<1x16xf32, #tpu.memory_space<vmem>>, vector<1x16xf32>
    %139 = vector.broadcast %138 : vector<1x16xf32> to vector<32x16xf32>
    %140 = arith.addf %137, %139 : vector<32x16xf32>
    %141 = arith.addf %133, %140 : vector<32x16xf32>
    %cst_170 = arith.constant 0.000000e+00 : f32
    %142 = vector.broadcast %cst_170 : f32 to vector<32x16xf32>
    %143 = arith.maximumf %141, %142 : vector<32x16xf32>
    %144 = vector.shape_cast %143 : vector<32x16xf32> to vector<4x8x16xf32>
    %145 = vector.extract_strided_slice %144 {offsets = [0, 0, 0], sizes = [4, 4, 16], strides = [1, 1, 1]} : vector<4x8x16xf32> to vector<4x4x16xf32>
    %c0_171 = arith.constant 0 : index
    %c0_172 = arith.constant 0 : index
    %c0_173 = arith.constant 0 : index
    %c0_174 = arith.constant 0 : index
    %146 = vector.load %arg11[%c0_171, %c0_172, %c0_173, %c0_174] : memref<1x4x4x16xf32, #tpu.memory_space<vmem>>, vector<1x4x4x16xf32>
    %147 = vector.shape_cast %146 : vector<1x4x4x16xf32> to vector<4x4x16xf32>
    %148 = vector.shape_cast %145 : vector<4x4x16xf32> to vector<1x4x4x16xf32>
    tpu.vector_store %arg11[%c0_171, %c0_172, %c0_173, %c0_174], %148 {strides = array<i32>} : memref<1x4x4x16xf32, #tpu.memory_space<vmem>>, vector<1x4x4x16xf32>,
    return
  }
  func.func @transform_0(%arg0: i32) -> (i32, i32, i32, i32, i32) {
    %c0_i32 = arith.constant 0 : i32
    %c0_i32_0 = arith.constant 0 : i32
    %c0_i32_1 = arith.constant 0 : i32
    %c0_i32_2 = arith.constant 0 : i32
    %c0_i32_3 = arith.constant 0 : i32
    return %arg0, %c0_i32, %c0_i32_0, %c0_i32_1, %c0_i32_2 : i32, i32, i32, i32, i32
  }
  func.func @transform_1(%arg0: i32) -> (i32, i32, i32, i32) {
    %c0_i32 = arith.constant 0 : i32
    %c0_i32_0 = arith.constant 0 : i32
    %c0_i32_1 = arith.constant 0 : i32
    %c0_i32_2 = arith.constant 0 : i32
    %c0_i32_3 = arith.constant 0 : i32
    return %c0_i32, %c0_i32_0, %c0_i32_1, %c0_i32_2 : i32, i32, i32, i32
  }
  func.func @transform_2(%arg0: i32) -> (i32, i32) {
    %c0_i32 = arith.constant 0 : i32
    %c0_i32_0 = arith.constant 0 : i32
    %c0_i32_1 = arith.constant 0 : i32
    return %c0_i32, %c0_i32_0 : i32, i32
  }
  func.func @transform_3(%arg0: i32) -> (i32, i32) {
    %c0_i32 = arith.constant 0 : i32
    %c0_i32_0 = arith.constant 0 : i32
    %c0_i32_1 = arith.constant 0 : i32
    return %c0_i32, %c0_i32_0 : i32, i32
  }
  func.func @transform_4(%arg0: i32) -> (i32, i32, i32, i32) {
    %c0_i32 = arith.constant 0 : i32
    %c0_i32_0 = arith.constant 0 : i32
    %c0_i32_1 = arith.constant 0 : i32
    %c0_i32_2 = arith.constant 0 : i32
    %c0_i32_3 = arith.constant 0 : i32
    return %c0_i32, %c0_i32_0, %c0_i32_1, %c0_i32_2 : i32, i32, i32, i32
  }
  func.func @transform_5(%arg0: i32) -> (i32, i32) {
    %c0_i32 = arith.constant 0 : i32
    %c0_i32_0 = arith.constant 0 : i32
    %c0_i32_1 = arith.constant 0 : i32
    return %c0_i32, %c0_i32_0 : i32, i32
  }
  func.func @transform_6(%arg0: i32) -> (i32, i32) {
    %c0_i32 = arith.constant 0 : i32
    %c0_i32_0 = arith.constant 0 : i32
    %c0_i32_1 = arith.constant 0 : i32
    return %c0_i32, %c0_i32_0 : i32, i32
  }
  func.func @transform_7(%arg0: i32) -> (i32, i32) {
    %c0_i32 = arith.constant 0 : i32
    %c0_i32_0 = arith.constant 0 : i32
    %c0_i32_1 = arith.constant 0 : i32
    return %c0_i32, %c0_i32_0 : i32, i32
  }
  func.func @transform_8(%arg0: i32) -> (i32, i32) {
    %c0_i32 = arith.constant 0 : i32
    %c0_i32_0 = arith.constant 0 : i32
    %c0_i32_1 = arith.constant 0 : i32
    return %c0_i32, %c0_i32_0 : i32, i32
  }
  func.func @transform_9(%arg0: i32) -> (i32, i32) {
    %c0_i32 = arith.constant 0 : i32
    %c0_i32_0 = arith.constant 0 : i32
    %c0_i32_1 = arith.constant 0 : i32
    return %c0_i32, %c0_i32_0 : i32, i32
  }
  func.func @transform_10(%arg0: i32) -> (i32, i32, i32, i32) {
    %c0_i32 = arith.constant 0 : i32
    %c0_i32_0 = arith.constant 0 : i32
    %c0_i32_1 = arith.constant 0 : i32
    %c0_i32_2 = arith.constant 0 : i32
    return %arg0, %c0_i32, %c0_i32_0, %c0_i32_1 : i32, i32, i32, i32
  }
}

</mosaic_0001>

<llo_original>
// kernel: bottleneck_forward.1
$region0: #{bottleneck_forward.1}
  #allocation0 [shape = 'u32[]', space=smem, size = 0x4, offset = 0x4, fixed_abs, tag = 'smem constant byte address 0x4 - core index']
  #allocation1 [shape = 'u32[144,128]{1,0:T(1,128)}', space=vmem, size = 0x12000, scoped, tag = 'internal scratch']
  #allocation2 [shape = 'bf16[2,2,48,4]{3,2,1,0:T(16,128)(2,1)}', space=vmem, size = 0xc000, scoped, tag = 'scratch operand']
  %s0 = inlined_call_operand.hbm [shape: bf16[2,2,2,48,4], index: 0, kind: input, shape index: {}]
  %s1 = inlined_call_operand.hbm [shape: f32[2,2,48,1], index: 1, kind: input, shape index: {}]
  %s2 = inlined_call_operand.hbm [shape: bf16[4,4], index: 2, kind: input, shape index: {}]
  %s3 = inlined_call_operand.hbm [shape: f32[1,4], index: 3, kind: input, shape index: {}]
  %s4 = inlined_call_operand.hbm [shape: bf16[3,3,4,4], index: 4, kind: input, shape index: {}]
  %s5 = inlined_call_operand.hbm [shape: f32[1,4], index: 5, kind: input, shape index: {}]
  %s6 = inlined_call_operand.hbm [shape: bf16[4,16], index: 6, kind: input, shape index: {}]
  %s7 = inlined_call_operand.hbm [shape: f32[1,16], index: 7, kind: input, shape index: {}]
  %s8 = inlined_call_operand.hbm [shape: bf16[4,16], index: 8, kind: input, shape index: {}]
  %s9 = inlined_call_operand.hbm [shape: f32[1,16], index: 9, kind: input, shape index: {}]
  %s10 = inlined_call_operand.hbm [shape: f32[2,4,4,16], index: 10, kind: output, shape index: {}]
  %s11 = sld [smem:[#allocation0]]
  $region113: #{bottleneck_forward.1} parent=0
    _
  %s13 = ssub.s32 1, %s11
  %s14 = scalar_select 0, %s13, %s11
  $region1: #{bottleneck_forward.1} parent=0
    #allocation3 [shape = 'u8[98304]{0}', space=vmem, size = 0x18000, scoped, tag = 'input window, operand 0']
    #allocation4 [shape = 's32[2]{0}', space=sflag, size = 0x8, scoped, tag = 'scoped memory for bottleneck_forward.1']
    #allocation5 [shape = 's32[2]{0}', space=sflag, size = 0x8, scoped, tag = 'scoped memory for bottleneck_forward.1']
    #allocation6 [shape = 'u8[98304]{0}', space=vmem, size = 0x18000, scoped, tag = 'input window, operand 1, single buffered']
    #allocation7 [shape = 's32[1]{0}', space=sflag, size = 0x4, scoped, tag = 'scoped memory for bottleneck_forward.1']
    #allocation8 [shape = 'u8[1024]{0}', space=vmem, size = 0x400, scoped, tag = 'input window, operand 2, single buffered']
    #allocation9 [shape = 'u8[512]{0}', space=vmem, size = 0x400, scoped, tag = 'input window, operand 3, single buffered']
    #allocation10 [shape = 's32[1]{0}', space=sflag, size = 0x4, scoped, tag = 'scoped memory for bottleneck_forward.1']
    #allocation11 [shape = 'u8[9216]{0}', space=vmem, size = 0x2400, scoped, tag = 'input window, operand 4, single buffered']
    #allocation12 [shape = 'u8[512]{0}', space=vmem, size = 0x400, scoped, tag = 'input window, operand 5, single buffered']
    #allocation13 [shape = 's32[1]{0}', space=sflag, size = 0x4, scoped, tag = 'scoped memory for bottleneck_forward.1']
    #allocation14 [shape = 'u8[1024]{0}', space=vmem, size = 0x400, scoped, tag = 'input window, operand 6, single buffered']
    #allocation15 [shape = 'u8[512]{0}', space=vmem, size = 0x400, scoped, tag = 'input window, operand 7, single buffered']
    #allocation16 [shape = 's32[1]{0}', space=sflag, size = 0x4, scoped, tag = 'scoped memory for bottleneck_forward.1']
    #allocation17 [shape = 'u8[1024]{0}', space=vmem, size = 0x400, scoped, tag = 'input window, operand 8, single buffered']
    #allocation18 [shape = 'u8[512]{0}', space=vmem, size = 0x400, scoped, tag = 'input window, operand 9, single buffered']
    #allocation19 [shape = 's32[1]{0}', space=sflag, size = 0x4, scoped, tag = 'scoped memory for bottleneck_forward.1']
    #allocation20 [shape = 'u8[16384]{0}', space=vmem, size = 0x4000, scoped, tag = 'output window, operand 0']
    %15 = vsyncpa [#allocation4], 0
    %s16 = scalar_lea.sflag [#allocation4], 1
    %17 = vsyncpa %s16, 0
    %18 = vsyncpa [#allocation7], 0
    %19 = vsyncpa [#allocation10], 0
    %20 = vsyncpa [#allocation13], 0
    %21 = vsyncpa [#allocation16], 0
    %22 = vsyncpa [#allocation19], 0
    %23 = vsyncpa [#allocation5], 0
    %s24 = scalar_lea.sflag [#allocation5], 1
    %25 = vsyncpa %s24, 0
    loop: start=0, step=1, limit=4
    $region2: #{bottleneck_forward.1} parent=1 // loop_pre_header
      _
    $region3: #{bottleneck_forward.1} parent=1 // loop_header
      %s27 = sphi 0, %s31
      %p28 = scmp.ge.s32.totalorder %s27, 4
      %s37 = sphi 0, %s39
      %s40 = sphi 0, %s37
      %s41 = sphi 0, %s40
      %s57 = sphi 0, %s41
      %s61 = sphi 0, %s61
      %s63 = sphi 0, %s61
      %s64 = sphi 0, %s63
      %s78 = sphi 0, %s64
      %s82 = sphi 0, %s82
      %s84 = sphi 0, %s82
      %s85 = sphi 0, %s84
      %s99 = sphi 0, %s85
      %s103 = sphi 0, %s103
      %s105 = sphi 0, %s103
      %s106 = sphi 0, %s105
      %s120 = sphi 0, %s106
      %s124 = sphi 0, %s124
      %s126 = sphi 0, %s124
      %s127 = sphi 0, %s126
      %s141 = sphi 0, %s127
      %s145 = sphi 0, %s145
      %s147 = sphi 0, %s145
      %s148 = sphi 0, %s147
      %s162 = sphi 0, %s148
      %s166 = sphi 0, %s166
      %s168 = sphi 0, %s166
      %s169 = sphi 0, %s168
      %s183 = sphi 0, %s169
      %s187 = sphi 0, %s187
      %s189 = sphi 0, %s187
      %s190 = sphi 0, %s189
      %s204 = sphi 0, %s190
      %s208 = sphi 0, %s208
      %s210 = sphi 0, %s208
      %s211 = sphi 0, %s210
      %s225 = sphi 0, %s211
      %s229 = sphi 0, %s229
      %s231 = sphi 0, %s229
      %s232 = sphi 0, %s231
      %s246 = sphi 0, %s232
      %s252 = sphi 0, %s254
      %s255 = sphi 0, %s252
      %s256 = sphi 0, %s255
      %s272 = sphi 0, %s256
    $region4: #{bottleneck_forward.1} parent=1 // loop_header_branch
      %30 = sbr.rel (%p28) target = $region8
    $region5: #{bottleneck_forward.1} parent=1 // loop_body
      %s32 = ssub.s32 %s27, 1
      %s33 = ssub.s32 %s27, 2
      %s34 = sadd.s32 %s27, 1
      %s35 = ssub.s32 %s27, %s34
      %p36 = scmp.eq.s32.totalorder %s35, 0
      %s38 = sadd.s32 %s37, 1
      %s39 = scalar_select %p36, %s37, %s38
      %p42 = pneg %p36
      %p43 = scmp.eq.s32.totalorder %s27, 1
      %p44 = por %p42, %p43
      %p45 = scmp.ne.s32.totalorder %s37, %s40
      %p46 = scmp.eq.s32.totalorder %s27, 0
      %p47 = por %p45, %p46
      %p48 = scmp.ne.s32.totalorder %s37, %s40
      %p49 = scmp.eq.s32.totalorder %s32, 1
      %p50 = por %p48, %p49
      %p51 = scmp.ne.s32.totalorder %s40, %s41
      %p52 = scmp.eq.s32.totalorder %s32, 0
      %p53 = por %p51, %p52
      %p54 = scmp.ne.s32.totalorder %s40, %s41
      %p55 = scmp.eq.s32.totalorder %s33, 1
      %p56 = por %p54, %p55
      %p58 = scmp.ne.s32.totalorder %s41, %s57
      %p59 = scmp.eq.s32.totalorder %s33, 0
      %p60 = por %p58, %p59
      %s62 = sadd.s32 %s61, 1
      %p65 = scmp.eq.s32.totalorder %s27, 1
      %p66 = scmp.ne.s32.totalorder %s61, %s63
      %p67 = scmp.eq.s32.totalorder %s27, 0
      %p68 = por %p66, %p67
      %p69 = scmp.ne.s32.totalorder %s61, %s63
      %p70 = scmp.eq.s32.totalorder %s32, 1
      %p71 = por %p69, %p70
      %p72 = scmp.ne.s32.totalorder %s63, %s64
      %p73 = scmp.eq.s32.totalorder %s32, 0
      %p74 = por %p72, %p73
      %p75 = scmp.ne.s32.totalorder %s63, %s64
      %p76 = scmp.eq.s32.totalorder %s33, 1
      %p77 = por %p75, %p76
      %p79 = scmp.ne.s32.totalorder %s64, %s78
      %p80 = scmp.eq.s32.totalorder %s33, 0
      %p81 = por %p79, %p80
      %s83 = sadd.s32 %s82, 1
      %p86 = scmp.eq.s32.totalorder %s27, 1
      %p87 = scmp.ne.s32.totalorder %s82, %s84
      %p88 = scmp.eq.s32.totalorder %s27, 0
      %p89 = por %p87, %p88
      %p90 = scmp.ne.s32.totalorder %s82, %s84
      %p91 = scmp.eq.s32.totalorder %s32, 1
      %p92 = por %p90, %p91
      %p93 = scmp.ne.s32.totalorder %s84, %s85
      %p94 = scmp.eq.s32.totalorder %s32, 0
      %p95 = por %p93, %p94
      %p96 = scmp.ne.s32.totalorder %s84, %s85
      %p97 = scmp.eq.s32.totalorder %s33, 1
      %p98 = por %p96, %p97
      %p100 = scmp.ne.s32.totalorder %s85, %s99
      %p101 = scmp.eq.s32.totalorder %s33, 0
      %p102 = por %p100, %p101
      %s104 = sadd.s32 %s103, 1
      %p107 = scmp.eq.s32.totalorder %s27, 1
      %p108 = scmp.ne.s32.totalorder %s103, %s105
      %p109 = scmp.eq.s32.totalorder %s27, 0
      %p110 = por %p108, %p109
      %p111 = scmp.ne.s32.totalorder %s103, %s105
      %p112 = scmp.eq.s32.totalorder %s32, 1
      %p113 = por %p111, %p112
      %p114 = scmp.ne.s32.totalorder %s105, %s106
      %p115 = scmp.eq.s32.totalorder %s32, 0
      %p116 = por %p114, %p115
      %p117 = scmp.ne.s32.totalorder %s105, %s106
      %p118 = scmp.eq.s32.totalorder %s33, 1
      %p119 = por %p117, %p118
      %p121 = scmp.ne.s32.totalorder %s106, %s120
      %p122 = scmp.eq.s32.totalorder %s33, 0
      %p123 = por %p121, %p122
      %s125 = sadd.s32 %s124, 1
      %p128 = scmp.eq.s32.totalorder %s27, 1
      %p129 = scmp.ne.s32.totalorder %s124, %s126
      %p130 = scmp.eq.s32.totalorder %s27, 0
      %p131 = por %p129, %p130
      %p132 = scmp.ne.s32.totalorder %s124, %s126
      %p133 = scmp.eq.s32.totalorder %s32, 1
      %p134 = por %p132, %p133
      %p135 = scmp.ne.s32.totalorder %s126, %s127
      %p136 = scmp.eq.s32.totalorder %s32, 0
      %p137 = por %p135, %p136
      %p138 = scmp.ne.s32.totalorder %s126, %s127
      %p139 = scmp.eq.s32.totalorder %s33, 1
      %p140 = por %p138, %p139
      %p142 = scmp.ne.s32.totalorder %s127, %s141
      %p143 = scmp.eq.s32.totalorder %s33, 0
      %p144 = por %p142, %p143
      %s146 = sadd.s32 %s145, 1
      %p149 = scmp.eq.s32.totalorder %s27, 1
      %p150 = scmp.ne.s32.totalorder %s145, %s147
      %p151 = scmp.eq.s32.totalorder %s27, 0
      %p152 = por %p150, %p151
      %p153 = scmp.ne.s32.totalorder %s145, %s147
      %p154 = scmp.eq.s32.totalorder %s32, 1
      %p155 = por %p153, %p154
      %p156 = scmp.ne.s32.totalorder %s147, %s148
      %p157 = scmp.eq.s32.totalorder %s32, 0
      %p158 = por %p156, %p157
      %p159 = scmp.ne.s32.totalorder %s147, %s148
      %p160 = scmp.eq.s32.totalorder %s33, 1
      %p161 = por %p159, %p160
      %p163 = scmp.ne.s32.totalorder %s148, %s162
      %p164 = scmp.eq.s32.totalorder %s33, 0
      %p165 = por %p163, %p164
      %s167 = sadd.s32 %s166, 1
      %p170 = scmp.eq.s32.totalorder %s27, 1
      %p171 = scmp.ne.s32.totalorder %s166, %s168
      %p172 = scmp.eq.s32.totalorder %s27, 0
      %p173 = por %p171, %p172
      %p174 = scmp.ne.s32.totalorder %s166, %s168
      %p175 = scmp.eq.s32.totalorder %s32, 1
      %p176 = por %p174, %p175
      %p177 = scmp.ne.s32.totalorder %s168, %s169
      %p178 = scmp.eq.s32.totalorder %s32, 0
      %p179 = por %p177, %p178
      %p180 = scmp.ne.s32.totalorder %s168, %s169
      %p181 = scmp.eq.s32.totalorder %s33, 1
      %p182 = por %p180, %p181
      %p184 = scmp.ne.s32.totalorder %s169, %s183
      %p185 = scmp.eq.s32.totalorder %s33, 0
      %p186 = por %p184, %p185
      %s188 = sadd.s32 %s187, 1
      %p191 = scmp.eq.s32.totalorder %s27, 1
      %p192 = scmp.ne.s32.totalorder %s187, %s189
      %p193 = scmp.eq.s32.totalorder %s27, 0
      %p194 = por %p192, %p193
      %p195 = scmp.ne.s32.totalorder %s187, %s189
      %p196 = scmp.eq.s32.totalorder %s32, 1
      %p197 = por %p195, %p196
      %p198 = scmp.ne.s32.totalorder %s189, %s190
      %p199 = scmp.eq.s32.totalorder %s32, 0
      %p200 = por %p198, %p199
      %p201 = scmp.ne.s32.totalorder %s189, %s190
      %p202 = scmp.eq.s32.totalorder %s33, 1
      %p203 = por %p201, %p202
      %p205 = scmp.ne.s32.totalorder %s190, %s204
      %p206 = scmp.eq.s32.totalorder %s33, 0
      %p207 = por %p205, %p206
      %s209 = sadd.s32 %s208, 1
      %p212 = scmp.eq.s32.totalorder %s27, 1
      %p213 = scmp.ne.s32.totalorder %s208, %s210
      %p214 = scmp.eq.s32.totalorder %s27, 0
      %p215 = por %p213, %p214
      %p216 = scmp.ne.s32.totalorder %s208, %s210
      %p217 = scmp.eq.s32.totalorder %s32, 1
      %p218 = por %p216, %p217
      %p219 = scmp.ne.s32.totalorder %s210, %s211
      %p220 = scmp.eq.s32.totalorder %s32, 0
      %p221 = por %p219, %p220
      %p222 = scmp.ne.s32.totalorder %s210, %s211
      %p223 = scmp.eq.s32.totalorder %s33, 1
      %p224 = por %p222, %p223
      %p226 = scmp.ne.s32.totalorder %s211, %s225
      %p227 = scmp.eq.s32.totalorder %s33, 0
      %p228 = por %p226, %p227
      %s230 = sadd.s32 %s229, 1
      %p233 = scmp.eq.s32.totalorder %s27, 1
      %p234 = scmp.ne.s32.totalorder %s229, %s231
      %p235 = scmp.eq.s32.totalorder %s27, 0
      %p236 = por %p234, %p235
      %p237 = scmp.ne.s32.totalorder %s229, %s231
      %p238 = scmp.eq.s32.totalorder %s32, 1
      %p239 = por %p237, %p238
      %p240 = scmp.ne.s32.totalorder %s231, %s232
      %p241 = scmp.eq.s32.totalorder %s32, 0
      %p242 = por %p240, %p241
      %p243 = scmp.ne.s32.totalorder %s231, %s232
      %p244 = scmp.eq.s32.totalorder %s33, 1
      %p245 = por %p243, %p244
      %p247 = scmp.ne.s32.totalorder %s232, %s246
      %p248 = scmp.eq.s32.totalorder %s33, 0
      %p249 = por %p247, %p248
      %s250 = ssub.s32 %s27, %s34
      %p251 = scmp.eq.s32.totalorder %s250, 0
      %s253 = sadd.s32 %s252, 1
      %s254 = scalar_select %p251, %s252, %s253
      %p257 = pneg %p251
      %p258 = scmp.eq.s32.totalorder %s27, 1
      %p259 = por %p257, %p258
      %p260 = scmp.ne.s32.totalorder %s252, %s255
      %p261 = scmp.eq.s32.totalorder %s27, 0
      %p262 = por %p260, %p261
      %p263 = scmp.ne.s32.totalorder %s252, %s255
      %p264 = scmp.eq.s32.totalorder %s32, 1
      %p265 = por %p263, %p264
      %p266 = scmp.ne.s32.totalorder %s255, %s256
      %p267 = scmp.eq.s32.totalorder %s32, 0
      %p268 = por %p266, %p267
      %p269 = scmp.ne.s32.totalorder %s255, %s256
      %p270 = scmp.eq.s32.totalorder %s33, 1
      %p271 = por %p269, %p270
      %p273 = scmp.ne.s32.totalorder %s256, %s272
      %p274 = scmp.eq.s32.totalorder %s33, 0
      %p275 = por %p273, %p274
      %p276 = scmp.le.s32.totalorder 1, %s27
      %p277 = scmp.lt.s32.totalorder %s27, 3
      %p278 = pnand %p276, %p277
      %p279 = pneg %p278
      // Predicated region
      $region9: #{bottleneck_forward.1} parent=5 // pred_check
        _
      $region10: #{bottleneck_forward.1} parent=5 // pred_check_branch
        %281 = sbr.rel (%p278) target = $region12
      $region11: #{bottleneck_forward.1} parent=5 // pred_region
        %s282 = ssub.s32 %s27, 1
        // Predicated region
        $region13: #{bottleneck_forward.1} parent=11 // pred_check
          %p283 = pneg %p74
        $region14: #{bottleneck_forward.1} parent=11 // pred_check_branch
          %285 = sbr.rel (%p283) target = $region16
        $region15: #{bottleneck_forward.1} parent=11 // pred_region
          %s287 = ssub.s32 3072, 3072
          %288 = vsyncadd [#allocation7], %s287
          %s289 = sshll.u32 [#allocation6], 4
          %s290 = int_to_ptr.vmem [resolvable:$true] %s289
          %295 = dma.hbm_to_vmem [thread:$0]  %s1, 3072, %s290, [#allocation7], 128, 128, 8
        $region16: #{bottleneck_forward.1} parent=11 // pred_fallthru
          _
        // Predicated region
        $region17: #{bottleneck_forward.1} parent=11 // pred_check
          %p296 = pneg %p95
        $region18: #{bottleneck_forward.1} parent=11 // pred_check_branch
          %298 = sbr.rel (%p296) target = $region20
        $region19: #{bottleneck_forward.1} parent=11 // pred_region
          %s300 = ssub.s32 32, 32
          %301 = vsyncadd [#allocation7], %s300
          %s303 = sshll.u32 [#allocation8], 4
          %s304 = int_to_ptr.vmem [resolvable:$true] %s303
          %306 = dma.hbm_to_vmem [thread:$0]  %s2, 32, %s304, [#allocation7]
        $region20: #{bottleneck_forward.1} parent=11 // pred_fallthru
          _
        // Predicated region
        $region21: #{bottleneck_forward.1} parent=11 // pred_check
          %p307 = pneg %p116
        $region22: #{bottleneck_forward.1} parent=11 // pred_check_branch
          %309 = sbr.rel (%p307) target = $region24
        $region23: #{bottleneck_forward.1} parent=11 // pred_region
          %s311 = ssub.s32 16, 16
          %312 = vsyncadd [#allocation10], %s311
          %s314 = sshll.u32 [#allocation9], 4
          %s315 = int_to_ptr.vmem [resolvable:$true] %s314
          %317 = dma.hbm_to_vmem [thread:$0]  %s3, 16, %s315, [#allocation10]
        $region24: #{bottleneck_forward.1} parent=11 // pred_fallthru
          _
        // Predicated region
        $region25: #{bottleneck_forward.1} parent=11 // pred_check
          %p318 = pneg %p137
        $region26: #{bottleneck_forward.1} parent=11 // pred_check_branch
          %320 = sbr.rel (%p318) target = $region28
        $region27: #{bottleneck_forward.1} parent=11 // pred_region
          %s322 = ssub.s32 288, 288
          %323 = vsyncadd [#allocation10], %s322
          %s324 = sshll.u32 [#allocation11], 4
          %s325 = int_to_ptr.vmem [resolvable:$true] %s324
          %330 = dma.hbm_to_vmem [thread:$0]  %s4, 288, %s325, [#allocation10], 32, 32, 2
        $region28: #{bottleneck_forward.1} parent=11 // pred_fallthru
          _
        // Predicated region
        $region29: #{bottleneck_forward.1} parent=11 // pred_check
          %p331 = pneg %p158
        $region30: #{bottleneck_forward.1} parent=11 // pred_check_branch
          %333 = sbr.rel (%p331) target = $region32
        $region31: #{bottleneck_forward.1} parent=11 // pred_region
          %s335 = ssub.s32 16, 16
          %336 = vsyncadd [#allocation13], %s335
          %s338 = sshll.u32 [#allocation12], 4
          %s339 = int_to_ptr.vmem [resolvable:$true] %s338
          %341 = dma.hbm_to_vmem [thread:$0]  %s5, 16, %s339, [#allocation13]
        $region32: #{bottleneck_forward.1} parent=11 // pred_fallthru
          _
        // Predicated region
        $region33: #{bottleneck_forward.1} parent=11 // pred_check
          %p342 = pneg %p179
        $region34: #{bottleneck_forward.1} parent=11 // pred_check_branch
          %344 = sbr.rel (%p342) target = $region36
        $region35: #{bottleneck_forward.1} parent=11 // pred_region
          %s346 = ssub.s32 32, 32
          %347 = vsyncadd [#allocation13], %s346
          %s349 = sshll.u32 [#allocation14], 4
          %s350 = int_to_ptr.vmem [resolvable:$true] %s349
          %352 = dma.hbm_to_vmem [thread:$0]  %s6, 32, %s350, [#allocation13]
        $region36: #{bottleneck_forward.1} parent=11 // pred_fallthru
          _
        // Predicated region
        $region37: #{bottleneck_forward.1} parent=11 // pred_check
          %p353 = pneg %p200
        $region38: #{bottleneck_forward.1} parent=11 // pred_check_branch
          %355 = sbr.rel (%p353) target = $region40
        $region39: #{bottleneck_forward.1} parent=11 // pred_region
          %s357 = ssub.s32 16, 16
          %358 = vsyncadd [#allocation16], %s357
          %s360 = sshll.u32 [#allocation15], 4
          %s361 = int_to_ptr.vmem [resolvable:$true] %s360
          %363 = dma.hbm_to_vmem [thread:$0]  %s7, 16, %s361, [#allocation16]
        $region40: #{bottleneck_forward.1} parent=11 // pred_fallthru
          _
        // Predicated region
        $region41: #{bottleneck_forward.1} parent=11 // pred_check
          %p364 = pneg %p221
        $region42: #{bottleneck_forward.1} parent=11 // pred_check_branch
          %366 = sbr.rel (%p364) target = $region44
        $region43: #{bottleneck_forward.1} parent=11 // pred_region
          %s368 = ssub.s32 32, 32
          %369 = vsyncadd [#allocation16], %s368
          %s371 = sshll.u32 [#allocation17], 4
          %s372 = int_to_ptr.vmem [resolvable:$true] %s371
          %374 = dma.hbm_to_vmem [thread:$0]  %s8, 32, %s372, [#allocation16]
        $region44: #{bottleneck_forward.1} parent=11 // pred_fallthru
          _
        // Predicated region
        $region45: #{bottleneck_forward.1} parent=11 // pred_check
          %p375 = pneg %p242
        $region46: #{bottleneck_forward.1} parent=11 // pred_check_branch
          %377 = sbr.rel (%p375) target = $region48
        $region47: #{bottleneck_forward.1} parent=11 // pred_region
          %s379 = ssub.s32 16, 16
          %380 = vsyncadd [#allocation19], %s379
          %s382 = sshll.u32 [#allocation18], 4
          %s383 = int_to_ptr.vmem [resolvable:$true] %s382
          %385 = dma.hbm_to_vmem [thread:$0]  %s9, 16, %s383, [#allocation19]
        $region48: #{bottleneck_forward.1} parent=11 // pred_fallthru
          _
      $region12: #{bottleneck_forward.1} parent=5 // pred_fallthru
        _
      %p386 = scmp.lt.s32.totalorder %s27, 2
      // Predicated region
      $region49: #{bottleneck_forward.1} parent=5 // pred_check
        %p387 = pneg %p386
      $region50: #{bottleneck_forward.1} parent=5 // pred_check_branch
        %389 = sbr.rel (%p387) target = $region52
      $region51: #{bottleneck_forward.1} parent=5 // pred_region
        // Predicated region
        $region53: #{bottleneck_forward.1} parent=51 // pred_check
          %p390 = pneg %p47
        $region54: #{bottleneck_forward.1} parent=51 // pred_check_branch
          %392 = sbr.rel (%p390) target = $region56
        $region55: #{bottleneck_forward.1} parent=51 // pred_region
          %s393 = sand.u32 %s37, 1
          %s394 = scalar_lea.sflag [#allocation4], %s393
          %s395 = sand.u32 %s37, 1
          %s396 = smul.addr %s395, 96
          %s397 = scalar_lea.vmem [#allocation3], %s396
          %s399 = ssub.s32 1536, 1536
          %400 = vsyncadd %s394, %s399
          %s401 = smul.addr %s27, 24
          %s402 = smul.addr %s401, 64
          %s403 = scalar_lea.hbm %s0, %s402
          %s404 = sshll.u32 %s397, 4
          %s405 = int_to_ptr.vmem [resolvable:$true] %s404
          %410 = dma.hbm_to_vmem [thread:$0]  %s403, 1536, %s405, %s394, 64, 64, 4
        $region56: #{bottleneck_forward.1} parent=51 // pred_fallthru
          _
      $region52: #{bottleneck_forward.1} parent=5 // pred_fallthru
        _
      %p411 = scmp.le.s32.totalorder 1, %s27
      %p412 = scmp.lt.s32.totalorder %s27, 3
      %p413 = pnand %p411, %p412
      %p414 = pneg %p413
      // Predicated region
      $region57: #{bottleneck_forward.1} parent=5 // pred_check
        _
      $region58: #{bottleneck_forward.1} parent=5 // pred_check_branch
        %416 = sbr.rel (%p413) target = $region60
      $region59: #{bottleneck_forward.1} parent=5 // pred_region
        %s417 = ssub.s32 %s27, 1
        %s418 = sand.u32 %s40, 1
        %s419 = scalar_lea.sflag [#allocation4], %s418
        %s420 = sand.u32 %s40, 1
        %s421 = smul.addr %s420, 96
        %s422 = scalar_lea.vmem [#allocation3], %s421
        // Predicated region
        $region61: #{bottleneck_forward.1} parent=59 // pred_check
          %p423 = pneg %p53
        $region62: #{bottleneck_forward.1} parent=59 // pred_check_branch
          %425 = sbr.rel (%p423) target = $region64
        $region63: #{bottleneck_forward.1} parent=59 // pred_region
          %426 = dma.done %s419, 1536
        $region64: #{bottleneck_forward.1} parent=59 // pred_fallthru
          _
        // Predicated region
        $region65: #{bottleneck_forward.1} parent=59 // pred_check
          %p427 = pneg %p74
        $region66: #{bottleneck_forward.1} parent=59 // pred_check_branch
          %429 = sbr.rel (%p427) target = $region68
        $region67: #{bottleneck_forward.1} parent=59 // pred_region
          %430 = dma.done [#allocation7], 3072
        $region68: #{bottleneck_forward.1} parent=59 // pred_fallthru
          _
        // Predicated region
        $region69: #{bottleneck_forward.1} parent=59 // pred_check
          %p431 = pneg %p95
        $region70: #{bottleneck_forward.1} parent=59 // pred_check_branch
          %433 = sbr.rel (%p431) target = $region72
        $region71: #{bottleneck_forward.1} parent=59 // pred_region
          %434 = dma.done [#allocation7], 32
        $region72: #{bottleneck_forward.1} parent=59 // pred_fallthru
          _
        // Predicated region
        $region73: #{bottleneck_forward.1} parent=59 // pred_check
          %p435 = pneg %p116
        $region74: #{bottleneck_forward.1} parent=59 // pred_check_branch
          %437 = sbr.rel (%p435) target = $region76
        $region75: #{bottleneck_forward.1} parent=59 // pred_region
          %438 = dma.done [#allocation10], 16
        $region76: #{bottleneck_forward.1} parent=59 // pred_fallthru
          _
        // Predicated region
        $region77: #{bottleneck_forward.1} parent=59 // pred_check
          %p439 = pneg %p137
        $region78: #{bottleneck_forward.1} parent=59 // pred_check_branch
          %441 = sbr.rel (%p439) target = $region80
        $region79: #{bottleneck_forward.1} parent=59 // pred_region
          %442 = dma.done [#allocation10], 288
        $region80: #{bottleneck_forward.1} parent=59 // pred_fallthru
          _
        // Predicated region
        $region81: #{bottleneck_forward.1} parent=59 // pred_check
          %p443 = pneg %p158
        $region82: #{bottleneck_forward.1} parent=59 // pred_check_branch
          %445 = sbr.rel (%p443) target = $region84
        $region83: #{bottleneck_forward.1} parent=59 // pred_region
          %446 = dma.done [#allocation13], 16
        $region84: #{bottleneck_forward.1} parent=59 // pred_fallthru
          _
        // Predicated region
        $region85: #{bottleneck_forward.1} parent=59 // pred_check
          %p447 = pneg %p179
        $region86: #{bottleneck_forward.1} parent=59 // pred_check_branch
          %449 = sbr.rel (%p447) target = $region88
        $region87: #{bottleneck_forward.1} parent=59 // pred_region
          %450 = dma.done [#allocation13], 32
        $region88: #{bottleneck_forward.1} parent=59 // pred_fallthru
          _
        // Predicated region
        $region89: #{bottleneck_forward.1} parent=59 // pred_check
          %p451 = pneg %p200
        $region90: #{bottleneck_forward.1} parent=59 // pred_check_branch
          %453 = sbr.rel (%p451) target = $region92
        $region91: #{bottleneck_forward.1} parent=59 // pred_region
          %454 = dma.done [#allocation16], 16
        $region92: #{bottleneck_forward.1} parent=59 // pred_fallthru
          _
        // Predicated region
        $region93: #{bottleneck_forward.1} parent=59 // pred_check
          %p455 = pneg %p221
        $region94: #{bottleneck_forward.1} parent=59 // pred_check_branch
          %457 = sbr.rel (%p455) target = $region96
        $region95: #{bottleneck_forward.1} parent=59 // pred_region
          %458 = dma.done [#allocation16], 32
        $region96: #{bottleneck_forward.1} parent=59 // pred_fallthru
          _
        // Predicated region
        $region97: #{bottleneck_forward.1} parent=59 // pred_check
          %p459 = pneg %p242
        $region98: #{bottleneck_forward.1} parent=59 // pred_check_branch
          %461 = sbr.rel (%p459) target = $region100
        $region99: #{bottleneck_forward.1} parent=59 // pred_region
          %462 = dma.done [#allocation19], 16
        $region100: #{bottleneck_forward.1} parent=59 // pred_fallthru
          _
        %s463 = sand.u32 %s40, 1
        %s464 = scalar_lea.sflag [#allocation4], %s463
        %s465 = sand.u32 %s40, 1
        %s466 = smul.addr %s465, 96
        %s467 = scalar_lea.vmem [#allocation3], %s466
        %p468 = pneg %p53
        %p469 = pneg %p50
        %p470 = pneg %p74
        %p471 = pneg %p71
        %p472 = pneg %p95
        %p473 = pneg %p92
        %p474 = pneg %p116
        %p475 = pneg %p113
        %p476 = pneg %p137
        %p477 = pneg %p134
        %p478 = pneg %p158
        %p479 = pneg %p155
        %p480 = pneg %p179
        %p481 = pneg %p176
        %p482 = pneg %p200
        %p483 = pneg %p197
        %p484 = pneg %p221
        %p485 = pneg %p218
        %p486 = pneg %p242
        %p487 = pneg %p239
        %p488 = pneg %p268
        %p489 = pneg %p265
        %s490 = sand.u32 %s255, 1
        %s491 = scalar_lea.sflag [#allocation5], %s490
        %s492 = sand.u32 %s255, 1
        %s493 = smul.addr %s492, 16
        %s494 = scalar_lea.vmem [#allocation20], %s493
        %v496 = vld [vmem:[%s422] sm:$0xf]
        %v497 = vld [vmem:[%s422 + $0x4] sm:$0xf]
        %v498 = vld [vmem:[%s422 + $0x8] sm:$0xf]
        %v499 = vld [vmem:[%s422 + $0xc] sm:$0xf]
        %v500 = vld [vmem:[%s422 + $0x10] sm:$0xf]
        %v501 = vld [vmem:[%s422 + $0x14] sm:$0xf]
        %v502 = vld [vmem:[#allocation8] sm:$0x3]
        %v503 = vld [vmem:[#allocation9] sm:$0x1]
        %v505 = vlaneseq
        %v506 = vshrl.u32 %v505, 7
        %v507 = vsub.s32 0, %v506
        %v508 = vrot.slane %v503, %v507
        %v516 = vunpack.c.l.b16 %v496
        %v517 = vunpack.c.l.b16 %v497
        %v518 = vunpack.c.l.b16 %v498
        %v519 = vunpack.c.l.b16 %v499
        %v520 = vunpack.c.l.b16 %v500
        %v521 = vunpack.c.l.b16 %v501
        %v522 = vpack.c.b16 %v517, %v516
        %v523 = vpack.c.b16 %v519, %v518
        %v524 = vpack.c.b16 %v521, %v520
        %vm525 = vcmask 31744
        %v527 = vsel %vm525, %v522, 0
        %v530 = vsel %vm525, %v523, 0
        %v533 = vsel %vm525, %v524, 0
        %vm535 = vcmask 1041408
        %v537 = vsel %vm535, %v502, 0
        %539 = vmatprep.subr.bf16.mxu0 0
        %540 = vmatpush1.bf16.msra.mxu0 %v537
        %541 = vmatprep.subr.bf16.mxu0 0
        %542 = vmatpush1.bf16.msra.mxu0 0
        %543 = vmatprep.subr.bf16.mxu0 0
        %544 = vmatpush1.bf16.msra.mxu0 0
        %545 = vmatprep.subr.bf16.mxu0 0
        %546 = vmatpush1.bf16.msra.mxu0 0
        %547 = vmatprep.subr.bf16.mxu0 0
        %548 = vmatpush1.bf16.msra.mxu0 0
        %549 = vmatprep.subr.bf16.mxu0 0
        %550 = vmatpush1.bf16.msra.mxu0 0
        %551 = vmatprep.subr.bf16.mxu0 0
        %552 = vmatpush1.bf16.msra.mxu0 0
        %553 = vmatprep.subr.bf16.mxu0 0
        %554 = vmatpush1.bf16.msra.mxu0 0
        %555 = vmatprep.subr.bf16.mxu0 0
        %556 = vmatpush1.bf16.msra.mxu0 0
        %557 = vmatprep.subr.bf16.mxu0 0
        %558 = vmatpush1.bf16.msra.mxu0 0
        %559 = vmatprep.subr.bf16.mxu0 0
        %560 = vmatpush1.bf16.msra.mxu0 0
        %561 = vmatprep.subr.bf16.mxu0 0
        %562 = vmatpush1.bf16.msra.mxu0 0
        %563 = vmatprep.subr.bf16.mxu0 0
        %564 = vmatpush1.bf16.msra.mxu0 0
        %565 = vmatprep.subr.bf16.mxu0 0
        %566 = vmatpush1.bf16.msra.mxu0 0
        %567 = vmatprep.subr.bf16.mxu0 0
        %568 = vmatpush1.bf16.msra.mxu0 0
        %569 = vmatprep.subr.bf16.mxu0 0
        %570 = vmatpush1.bf16.msra.mxu0 0
        %571 = vmatprep.mubr.bf16.mxu0 0
        %572 = vmatmul.mubr.bf16.gmra.mrb[0].mxu0 %v527
        %v573 = vpop.f32.mrb[0].mxu0
        %v574 = vadd.f32 %v508, %v573
        %v575 = vpop.f32.mrb[0].mxu0
        %v576 = vpop.f32.mrb[0].mxu0
        %v577 = vadd.f32 %v508, %v576
        %v578 = vpop.f32.mrb[0].mxu0
        %579 = vmatprep.mubr.bf16.mxu0 0
        %580 = vmatmul.mubr.bf16.gmra.mrb[0].mxu0 %v530
        %v581 = vpop.f32.mrb[0].mxu0
        %v582 = vadd.f32 %v508, %v581
        %v583 = vpop.f32.mrb[0].mxu0
        %v584 = vpop.f32.mrb[0].mxu0
        %v585 = vadd.f32 %v508, %v584
        %v586 = vpop.f32.mrb[0].mxu0
        %587 = vmatprep.mubr.bf16.mxu0 0
        %588 = vmatmul.mubr.bf16.gmra.mrb[0].mxu0 %v533
        %v589 = vpop.f32.mrb[0].mxu0
        %v590 = vadd.f32 %v508, %v589
        %v591 = vpop.f32.mrb[0].mxu0
        %v592 = vpop.f32.mrb[0].mxu0
        %v593 = vadd.f32 %v508, %v592
        %v594 = vpop.f32.mrb[0].mxu0
        %595 = vdwg.mxu0
        %v596 = vmax.f32 %v574, 0.0
        %v597 = vmax.f32 %v577, 0.0
        %v598 = vmax.f32 %v582, 0.0
        %v599 = vmax.f32 %v585, 0.0
        %v600 = vmax.f32 %v590, 0.0
        %v601 = vmax.f32 %v593, 0.0
        %v602 = vld [vmem:[#allocation6] sm:$0xff]
        %v603 = vld [vmem:[#allocation6 + $0x8] sm:$0xff]
        %v604 = vld [vmem:[#allocation6 + $0x10] sm:$0xff]
        %v605 = vld [vmem:[#allocation6 + $0x18] sm:$0xff]
        %v606 = vld [vmem:[#allocation6 + $0x20] sm:$0xff]
        %v607 = vld [vmem:[#allocation6 + $0x28] sm:$0xff]
        %609 = vset.pattern.permute.xlu0 0
        %610 = vperm.xlu0 %609, %v602
        %v611 = vpop.permute.xlu0 %610
        %614 = vset.pattern.permute.xlu0 0
        %615 = vperm.xlu0 %614, %v603
        %v616 = vpop.permute.xlu0 %615
        %619 = vset.pattern.permute.xlu0 0
        %620 = vperm.xlu0 %619, %v604
        %v621 = vpop.permute.xlu0 %620
        %624 = vset.pattern.permute.xlu0 0
        %625 = vperm.xlu0 %624, %v605
        %v626 = vpop.permute.xlu0 %625
        %629 = vset.pattern.permute.xlu0 0
        %630 = vperm.xlu0 %629, %v606
        %v631 = vpop.permute.xlu0 %630
        %634 = vset.pattern.permute.xlu0 0
        %635 = vperm.xlu0 %634, %v607
        %v636 = vpop.permute.xlu0 %635
        %v638 = vmul.f32 %v596, %v611
        %v639 = vmul.f32 %v597, %v616
        %v640 = vmul.f32 %v598, %v621
        %v641 = vmul.f32 %v599, %v626
        %v642 = vmul.f32 %v600, %v631
        %v643 = vmul.f32 %v601, %v636
        %v644 = vpack.c.bf16 %v639, %v638
        %v645 = vpack.c.bf16 %v641, %v640
        %v646 = vpack.c.bf16 %v643, %v642
        %647 = vst.msk [vmem:[#allocation2] sm:$0xff] %vm525, %v644
        %648 = vst.msk [vmem:[#allocation2 + $0x8] sm:$0xff] %vm525, %v645
        %649 = vst.msk [vmem:[#allocation2 + $0x10] sm:$0xff] %vm525, %v646
        %s650 = scalar_lea.vmem %s422, 24 [#allocation3]
        %v651 = vld [vmem:[%s650] sm:$0xf]
        %v652 = vld [vmem:[%s650 + $0x4] sm:$0xf]
        %v653 = vld [vmem:[%s650 + $0x8] sm:$0xf]
        %v654 = vld [vmem:[%s650 + $0xc] sm:$0xf]
        %v655 = vld [vmem:[%s650 + $0x10] sm:$0xf]
        %v656 = vld [vmem:[%s650 + $0x14] sm:$0xf]
        %v657 = vld [vmem:[#allocation8] sm:$0x3]
        %v658 = vld [vmem:[#allocation9] sm:$0x1]
        %v660 = vlaneseq
        %v661 = vshrl.u32 %v660, 7
        %v662 = vsub.s32 0, %v661
        %v663 = vrot.slane %v658, %v662
        %v671 = vunpack.c.l.b16 %v651
        %v672 = vunpack.c.l.b16 %v652
        %v673 = vunpack.c.l.b16 %v653
        %v674 = vunpack.c.l.b16 %v654
        %v675 = vunpack.c.l.b16 %v655
        %v676 = vunpack.c.l.b16 %v656
        %v677 = vpack.c.b16 %v672, %v671
        %v678 = vpack.c.b16 %v674, %v673
        %v679 = vpack.c.b16 %v676, %v675
        %v681 = vsel %vm525, %v677, 0
        %v684 = vsel %vm525, %v678, 0
        %v687 = vsel %vm525, %v679, 0
        %v690 = vsel %vm535, %v657, 0
        %692 = vmatprep.subr.bf16.mxu0 0
        %693 = vmatpush1.bf16.msra.mxu0 %v690
        %694 = vmatprep.subr.bf16.mxu0 0
        %695 = vmatpush1.bf16.msra.mxu0 0
        %696 = vmatprep.subr.bf16.mxu0 0
        %697 = vmatpush1.bf16.msra.mxu0 0
        %698 = vmatprep.subr.bf16.mxu0 0
        %699 = vmatpush1.bf16.msra.mxu0 0
        %700 = vmatprep.subr.bf16.mxu0 0
        %701 = vmatpush1.bf16.msra.mxu0 0
        %702 = vmatprep.subr.bf16.mxu0 0
        %703 = vmatpush1.bf16.msra.mxu0 0
        %704 = vmatprep.subr.bf16.mxu0 0
        %705 = vmatpush1.bf16.msra.mxu0 0
        %706 = vmatprep.subr.bf16.mxu0 0
        %707 = vmatpush1.bf16.msra.mxu0 0
        %708 = vmatprep.subr.bf16.mxu0 0
        %709 = vmatpush1.bf16.msra.mxu0 0
        %710 = vmatprep.subr.bf16.mxu0 0
        %711 = vmatpush1.bf16.msra.mxu0 0
        %712 = vmatprep.subr.bf16.mxu0 0
        %713 = vmatpush1.bf16.msra.mxu0 0
        %714 = vmatprep.subr.bf16.mxu0 0
        %715 = vmatpush1.bf16.msra.mxu0 0
        %716 = vmatprep.subr.bf16.mxu0 0
        %717 = vmatpush1.bf16.msra.mxu0 0
        %718 = vmatprep.subr.bf16.mxu0 0
        %719 = vmatpush1.bf16.msra.mxu0 0
        %720 = vmatprep.subr.bf16.mxu0 0
        %721 = vmatpush1.bf16.msra.mxu0 0
        %722 = vmatprep.subr.bf16.mxu0 0
        %723 = vmatpush1.bf16.msra.mxu0 0
        %724 = vmatprep.mubr.bf16.mxu0 0
        %725 = vmatmul.mubr.bf16.gmra.mrb[0].mxu0 %v681
        %v726 = vpop.f32.mrb[0].mxu0
        %v727 = vadd.f32 %v663, %v726
        %v728 = vpop.f32.mrb[0].mxu0
        %v729 = vpop.f32.mrb[0].mxu0
        %v730 = vadd.f32 %v663, %v729
        %v731 = vpop.f32.mrb[0].mxu0
        %732 = vmatprep.mubr.bf16.mxu0 0
        %733 = vmatmul.mubr.bf16.gmra.mrb[0].mxu0 %v684
        %v734 = vpop.f32.mrb[0].mxu0
        %v735 = vadd.f32 %v663, %v734
        %v736 = vpop.f32.mrb[0].mxu0
        %v737 = vpop.f32.mrb[0].mxu0
        %v738 = vadd.f32 %v663, %v737
        %v739 = vpop.f32.mrb[0].mxu0
        %740 = vmatprep.mubr.bf16.mxu0 0
        %741 = vmatmul.mubr.bf16.gmra.mrb[0].mxu0 %v687
        %v742 = vpop.f32.mrb[0].mxu0
        %v743 = vadd.f32 %v663, %v742
        %v744 = vpop.f32.mrb[0].mxu0
        %v745 = vpop.f32.mrb[0].mxu0
        %v746 = vadd.f32 %v663, %v745
        %v747 = vpop.f32.mrb[0].mxu0
        %748 = vdwg.mxu0
        %v749 = vmax.f32 %v727, 0.0
        %v750 = vmax.f32 %v730, 0.0
        %v751 = vmax.f32 %v735, 0.0
        %v752 = vmax.f32 %v738, 0.0
        %v753 = vmax.f32 %v743, 0.0
        %v754 = vmax.f32 %v746, 0.0
        %s755 = scalar_lea.vmem [#allocation6], 48
        %v756 = vld [vmem:[%s755] sm:$0xff]
        %v757 = vld [vmem:[%s755 + $0x8] sm:$0xff]
        %v758 = vld [vmem:[%s755 + $0x10] sm:$0xff]
        %v759 = vld [vmem:[%s755 + $0x18] sm:$0xff]
        %v760 = vld [vmem:[%s755 + $0x20] sm:$0xff]
        %v761 = vld [vmem:[%s755 + $0x28] sm:$0xff]
        %763 = vset.pattern.permute.xlu0 0
        %764 = vperm.xlu0 %763, %v756
        %v765 = vpop.permute.xlu0 %764
        %768 = vset.pattern.permute.xlu0 0
        %769 = vperm.xlu0 %768, %v757
        %v770 = vpop.permute.xlu0 %769
        %773 = vset.pattern.permute.xlu0 0
        %774 = vperm.xlu0 %773, %v758
        %v775 = vpop.permute.xlu0 %774
        %778 = vset.pattern.permute.xlu0 0
        %779 = vperm.xlu0 %778, %v759
        %v780 = vpop.permute.xlu0 %779
        %783 = vset.pattern.permute.xlu0 0
        %784 = vperm.xlu0 %783, %v760
        %v785 = vpop.permute.xlu0 %784
        %788 = vset.pattern.permute.xlu0 0
        %789 = vperm.xlu0 %788, %v761
        %v790 = vpop.permute.xlu0 %789
        %v792 = vmul.f32 %v749, %v765
        %v793 = vmul.f32 %v750, %v770
        %v794 = vmul.f32 %v751, %v775
        %v795 = vmul.f32 %v752, %v780
        %v796 = vmul.f32 %v753, %v785
        %v797 = vmul.f32 %v754, %v790
        %v798 = vpack.c.bf16 %v793, %v792
        %v799 = vpack.c.bf16 %v795, %v794
        %v800 = vpack.c.bf16 %v797, %v796
        %s801 = scalar_lea.vmem [#allocation2], 24
        %802 = vst.msk [vmem:[%s801] sm:$0xff] %vm525, %v798
        %803 = vst.msk [vmem:[%s801 + $0x8] sm:$0xff] %vm525, %v799
        %804 = vst.msk [vmem:[%s801 + $0x10] sm:$0xff] %vm525, %v800
        %s805 = scalar_lea.vmem %s422, 48 [#allocation3]
        %v806 = vld [vmem:[%s805] sm:$0xf]
        %v807 = vld [vmem:[%s805 + $0x4] sm:$0xf]
        %v808 = vld [vmem:[%s805 + $0x8] sm:$0xf]
        %v809 = vld [vmem:[%s805 + $0xc] sm:$0xf]
        %v810 = vld [vmem:[%s805 + $0x10] sm:$0xf]
        %v811 = vld [vmem:[%s805 + $0x14] sm:$0xf]
        %v812 = vld [vmem:[#allocation8] sm:$0x3]
        %v813 = vld [vmem:[#allocation9] sm:$0x1]
        %v815 = vlaneseq
        %v816 = vshrl.u32 %v815, 7
        %v817 = vsub.s32 0, %v816
        %v818 = vrot.slane %v813, %v817
        %v826 = vunpack.c.l.b16 %v806
        %v827 = vunpack.c.l.b16 %v807
        %v828 = vunpack.c.l.b16 %v808
        %v829 = vunpack.c.l.b16 %v809
        %v830 = vunpack.c.l.b16 %v810
        %v831 = vunpack.c.l.b16 %v811
        %v832 = vpack.c.b16 %v827, %v826
        %v833 = vpack.c.b16 %v829, %v828
        %v834 = vpack.c.b16 %v831, %v830
        %v836 = vsel %vm525, %v832, 0
        %v839 = vsel %vm525, %v833, 0
        %v842 = vsel %vm525, %v834, 0
        %v845 = vsel %vm535, %v812, 0
        %847 = vmatprep.subr.bf16.mxu0 0
        %848 = vmatpush1.bf16.msra.mxu0 %v845
        %849 = vmatprep.subr.bf16.mxu0 0
        %850 = vmatpush1.bf16.msra.mxu0 0
        %851 = vmatprep.subr.bf16.mxu0 0
        %852 = vmatpush1.bf16.msra.mxu0 0
        %853 = vmatprep.subr.bf16.mxu0 0
        %854 = vmatpush1.bf16.msra.mxu0 0
        %855 = vmatprep.subr.bf16.mxu0 0
        %856 = vmatpush1.bf16.msra.mxu0 0
        %857 = vmatprep.subr.bf16.mxu0 0
        %858 = vmatpush1.bf16.msra.mxu0 0
        %859 = vmatprep.subr.bf16.mxu0 0
        %860 = vmatpush1.bf16.msra.mxu0 0
        %861 = vmatprep.subr.bf16.mxu0 0
        %862 = vmatpush1.bf16.msra.mxu0 0
        %863 = vmatprep.subr.bf16.mxu0 0
        %864 = vmatpush1.bf16.msra.mxu0 0
        %865 = vmatprep.subr.bf16.mxu0 0
        %866 = vmatpush1.bf16.msra.mxu0 0
        %867 = vmatprep.subr.bf16.mxu0 0
        %868 = vmatpush1.bf16.msra.mxu0 0
        %869 = vmatprep.subr.bf16.mxu0 0
        %870 = vmatpush1.bf16.msra.mxu0 0
        %871 = vmatprep.subr.bf16.mxu0 0
        %872 = vmatpush1.bf16.msra.mxu0 0
        %873 = vmatprep.subr.bf16.mxu0 0
        %874 = vmatpush1.bf16.msra.mxu0 0
        %875 = vmatprep.subr.bf16.mxu0 0
        %876 = vmatpush1.bf16.msra.mxu0 0
        %877 = vmatprep.subr.bf16.mxu0 0
        %878 = vmatpush1.bf16.msra.mxu0 0
        %879 = vmatprep.mubr.bf16.mxu0 0
        %880 = vmatmul.mubr.bf16.gmra.mrb[0].mxu0 %v836
        %v881 = vpop.f32.mrb[0].mxu0
        %v882 = vadd.f32 %v818, %v881
        %v883 = vpop.f32.mrb[0].mxu0
        %v884 = vpop.f32.mrb[0].mxu0
        %v885 = vadd.f32 %v818, %v884
        %v886 = vpop.f32.mrb[0].mxu0
        %887 = vmatprep.mubr.bf16.mxu0 0
        %888 = vmatmul.mubr.bf16.gmra.mrb[0].mxu0 %v839
        %v889 = vpop.f32.mrb[0].mxu0
        %v890 = vadd.f32 %v818, %v889
        %v891 = vpop.f32.mrb[0].mxu0
        %v892 = vpop.f32.mrb[0].mxu0
        %v893 = vadd.f32 %v818, %v892
        %v894 = vpop.f32.mrb[0].mxu0
        %895 = vmatprep.mubr.bf16.mxu0 0
        %896 = vmatmul.mubr.bf16.gmra.mrb[0].mxu0 %v842
        %v897 = vpop.f32.mrb[0].mxu0
        %v898 = vadd.f32 %v818, %v897
        %v899 = vpop.f32.mrb[0].mxu0
        %v900 = vpop.f32.mrb[0].mxu0
        %v901 = vadd.f32 %v818, %v900
        %v902 = vpop.f32.mrb[0].mxu0
        %903 = vdwg.mxu0
        %v904 = vmax.f32 %v882, 0.0
        %v905 = vmax.f32 %v885, 0.0
        %v906 = vmax.f32 %v890, 0.0
        %v907 = vmax.f32 %v893, 0.0
        %v908 = vmax.f32 %v898, 0.0
        %v909 = vmax.f32 %v901, 0.0
        %s910 = scalar_lea.vmem [#allocation6], 96
        %v911 = vld [vmem:[%s910] sm:$0xff]
        %v912 = vld [vmem:[%s910 + $0x8] sm:$0xff]
        %v913 = vld [vmem:[%s910 + $0x10] sm:$0xff]
        %v914 = vld [vmem:[%s910 + $0x18] sm:$0xff]
        %v915 = vld [vmem:[%s910 + $0x20] sm:$0xff]
        %v916 = vld [vmem:[%s910 + $0x28] sm:$0xff]
        %918 = vset.pattern.permute.xlu0 0
        %919 = vperm.xlu0 %918, %v911
        %v920 = vpop.permute.xlu0 %919
        %923 = vset.pattern.permute.xlu0 0
        %924 = vperm.xlu0 %923, %v912
        %v925 = vpop.permute.xlu0 %924
        %928 = vset.pattern.permute.xlu0 0
        %929 = vperm.xlu0 %928, %v913
        %v930 = vpop.permute.xlu0 %929
        %933 = vset.pattern.permute.xlu0 0
        %934 = vperm.xlu0 %933, %v914
        %v935 = vpop.permute.xlu0 %934
        %938 = vset.pattern.permute.xlu0 0
        %939 = vperm.xlu0 %938, %v915
        %v940 = vpop.permute.xlu0 %939
        %943 = vset.pattern.permute.xlu0 0
        %944 = vperm.xlu0 %943, %v916
        %v945 = vpop.permute.xlu0 %944
        %v947 = vmul.f32 %v904, %v920
        %v948 = vmul.f32 %v905, %v925
        %v949 = vmul.f32 %v906, %v930
        %v950 = vmul.f32 %v907, %v935
        %v951 = vmul.f32 %v908, %v940
        %v952 = vmul.f32 %v909, %v945
        %v953 = vpack.c.bf16 %v948, %v947
        %v954 = vpack.c.bf16 %v950, %v949
        %v955 = vpack.c.bf16 %v952, %v951
        %s956 = scalar_lea.vmem [#allocation2], 48
        %957 = vst.msk [vmem:[%s956] sm:$0xff] %vm525, %v953
        %958 = vst.msk [vmem:[%s956 + $0x8] sm:$0xff] %vm525, %v954
        %959 = vst.msk [vmem:[%s956 + $0x10] sm:$0xff] %vm525, %v955
        %s960 = scalar_lea.vmem %s422, 72 [#allocation3]
        %v961 = vld [vmem:[%s960] sm:$0xf]
        %v962 = vld [vmem:[%s960 + $0x4] sm:$0xf]
        %v963 = vld [vmem:[%s960 + $0x8] sm:$0xf]
        %v964 = vld [vmem:[%s960 + $0xc] sm:$0xf]
        %v965 = vld [vmem:[%s960 + $0x10] sm:$0xf]
        %v966 = vld [vmem:[%s960 + $0x14] sm:$0xf]
        %v967 = vld [vmem:[#allocation8] sm:$0x3]
        %v968 = vld [vmem:[#allocation9] sm:$0x1]
        %v970 = vlaneseq
        %v971 = vshrl.u32 %v970, 7
        %v972 = vsub.s32 0, %v971
        %v973 = vrot.slane %v968, %v972
        %v981 = vunpack.c.l.b16 %v961
        %v982 = vunpack.c.l.b16 %v962
        %v983 = vunpack.c.l.b16 %v963
        %v984 = vunpack.c.l.b16 %v964
        %v985 = vunpack.c.l.b16 %v965
        %v986 = vunpack.c.l.b16 %v966
        %v987 = vpack.c.b16 %v982, %v981
        %v988 = vpack.c.b16 %v984, %v983
        %v989 = vpack.c.b16 %v986, %v985
        %v991 = vsel %vm525, %v987, 0
        %v994 = vsel %vm525, %v988, 0
        %v997 = vsel %vm525, %v989, 0
        %v1000 = vsel %vm535, %v967, 0
        %1002 = vmatprep.subr.bf16.mxu0 0
        %1003 = vmatpush1.bf16.msra.mxu0 %v1000
        %1004 = vmatprep.subr.bf16.mxu0 0
        %1005 = vmatpush1.bf16.msra.mxu0 0
        %1006 = vmatprep.subr.bf16.mxu0 0
        %1007 = vmatpush1.bf16.msra.mxu0 0
        %1008 = vmatprep.subr.bf16.mxu0 0
        %1009 = vmatpush1.bf16.msra.mxu0 0
        %1010 = vmatprep.subr.bf16.mxu0 0
        %1011 = vmatpush1.bf16.msra.mxu0 0
        %1012 = vmatprep.subr.bf16.mxu0 0
        %1013 = vmatpush1.bf16.msra.mxu0 0
        %1014 = vmatprep.subr.bf16.mxu0 0
        %1015 = vmatpush1.bf16.msra.mxu0 0
        %1016 = vmatprep.subr.bf16.mxu0 0
        %1017 = vmatpush1.bf16.msra.mxu0 0
        %1018 = vmatprep.subr.bf16.mxu0 0
        %1019 = vmatpush1.bf16.msra.mxu0 0
        %1020 = vmatprep.subr.bf16.mxu0 0
        %1021 = vmatpush1.bf16.msra.mxu0 0
        %1022 = vmatprep.subr.bf16.mxu0 0
        %1023 = vmatpush1.bf16.msra.mxu0 0
        %1024 = vmatprep.subr.bf16.mxu0 0
        %1025 = vmatpush1.bf16.msra.mxu0 0
        %1026 = vmatprep.subr.bf16.mxu0 0
        %1027 = vmatpush1.bf16.msra.mxu0 0
        %1028 = vmatprep.subr.bf16.mxu0 0
        %1029 = vmatpush1.bf16.msra.mxu0 0
        %1030 = vmatprep.subr.bf16.mxu0 0
        %1031 = vmatpush1.bf16.msra.mxu0 0
        %1032 = vmatprep.subr.bf16.mxu0 0
        %1033 = vmatpush1.bf16.msra.mxu0 0
        %1034 = vmatprep.mubr.bf16.mxu0 0
        %1035 = vmatmul.mubr.bf16.gmra.mrb[0].mxu0 %v991
        %v1036 = vpop.f32.mrb[0].mxu0
        %v1037 = vadd.f32 %v973, %v1036
        %v1038 = vpop.f32.mrb[0].mxu0
        %v1039 = vpop.f32.mrb[0].mxu0
        %v1040 = vadd.f32 %v973, %v1039
        %v1041 = vpop.f32.mrb[0].mxu0
        %1042 = vmatprep.mubr.bf16.mxu0 0
        %1043 = vmatmul.mubr.bf16.gmra.mrb[0].mxu0 %v994
        %v1044 = vpop.f32.mrb[0].mxu0
        %v1045 = vadd.f32 %v973, %v1044
        %v1046 = vpop.f32.mrb[0].mxu0
        %v1047 = vpop.f32.mrb[0].mxu0
        %v1048 = vadd.f32 %v973, %v1047
        %v1049 = vpop.f32.mrb[0].mxu0
        %1050 = vmatprep.mubr.bf16.mxu0 0
        %1051 = vmatmul.mubr.bf16.gmra.mrb[0].mxu0 %v997
        %v1052 = vpop.f32.mrb[0].mxu0
        %v1053 = vadd.f32 %v973, %v1052
        %v1054 = vpop.f32.mrb[0].mxu0
        %v1055 = vpop.f32.mrb[0].mxu0
        %v1056 = vadd.f32 %v973, %v1055
        %v1057 = vpop.f32.mrb[0].mxu0
        %1058 = vdwg.mxu0
        %v1059 = vmax.f32 %v1037, 0.0
        %v1060 = vmax.f32 %v1040, 0.0
        %v1061 = vmax.f32 %v1045, 0.0
        %v1062 = vmax.f32 %v1048, 0.0
        %v1063 = vmax.f32 %v1053, 0.0
        %v1064 = vmax.f32 %v1056, 0.0
        %s1065 = scalar_lea.vmem [#allocation6], 144
        %v1066 = vld [vmem:[%s1065] sm:$0xff]
        %v1067 = vld [vmem:[%s1065 + $0x8] sm:$0xff]
        %v1068 = vld [vmem:[%s1065 + $0x10] sm:$0xff]
        %v1069 = vld [vmem:[%s1065 + $0x18] sm:$0xff]
        %v1070 = vld [vmem:[%s1065 + $0x20] sm:$0xff]
        %v1071 = vld [vmem:[%s1065 + $0x28] sm:$0xff]
        %1073 = vset.pattern.permute.xlu0 0
        %1074 = vperm.xlu0 %1073, %v1066
        %v1075 = vpop.permute.xlu0 %1074
        %1078 = vset.pattern.permute.xlu0 0
        %1079 = vperm.xlu0 %1078, %v1067
        %v1080 = vpop.permute.xlu0 %1079
        %1083 = vset.pattern.permute.xlu0 0
        %1084 = vperm.xlu0 %1083, %v1068
        %v1085 = vpop.permute.xlu0 %1084
        %1088 = vset.pattern.permute.xlu0 0
        %1089 = vperm.xlu0 %1088, %v1069
        %v1090 = vpop.permute.xlu0 %1089
        %1093 = vset.pattern.permute.xlu0 0
        %1094 = vperm.xlu0 %1093, %v1070
        %v1095 = vpop.permute.xlu0 %1094
        %1098 = vset.pattern.permute.xlu0 0
        %1099 = vperm.xlu0 %1098, %v1071
        %v1100 = vpop.permute.xlu0 %1099
        %v1102 = vmul.f32 %v1059, %v1075
        %v1103 = vmul.f32 %v1060, %v1080
        %v1104 = vmul.f32 %v1061, %v1085
        %v1105 = vmul.f32 %v1062, %v1090
        %v1106 = vmul.f32 %v1063, %v1095
        %v1107 = vmul.f32 %v1064, %v1100
        %v1108 = vpack.c.bf16 %v1103, %v1102
        %v1109 = vpack.c.bf16 %v1105, %v1104
        %v1110 = vpack.c.bf16 %v1107, %v1106
        %s1111 = scalar_lea.vmem [#allocation2], 72
        %1112 = vst.msk [vmem:[%s1111] sm:$0xff] %vm525, %v1108
        %1113 = vst.msk [vmem:[%s1111 + $0x8] sm:$0xff] %vm525, %v1109
        %1114 = vst.msk [vmem:[%s1111 + $0x10] sm:$0xff] %vm525, %v1110
        %v1115 = vld [vmem:[#allocation2] sm:$0xff]
        %v1116 = vld [vmem:[#allocation2 + $0x8] sm:$0xff]
        %v1117 = vld [vmem:[#allocation11] sm:$0x3]
        %v1118 = vld [vmem:[%s801] sm:$0xff]
        %v1119 = vld [vmem:[%s801 + $0x8] sm:$0xff]
        %s1120 = scalar_lea.vmem [#allocation11], 2
        %v1121 = vld [vmem:[%s1120] sm:$0x3]
        %v1123 = vsel %vm525, %v1118, 0
        %v1126 = vsel %vm525, %v1119, 0
        %v1129 = vsel %vm535, %v1121, 0
        %1131 = vmatprep.subr.bf16.mxu0 0
        %1132 = vmatpush1.bf16.msra.mxu0 %v1129
        %1133 = vmatprep.subr.bf16.mxu0 0
        %1134 = vmatpush1.bf16.msra.mxu0 0
        %1135 = vmatprep.subr.bf16.mxu0 0
        %1136 = vmatpush1.bf16.msra.mxu0 0
        %1137 = vmatprep.subr.bf16.mxu0 0
        %1138 = vmatpush1.bf16.msra.mxu0 0
        %1139 = vmatprep.subr.bf16.mxu0 0
        %1140 = vmatpush1.bf16.msra.mxu0 0
        %1141 = vmatprep.subr.bf16.mxu0 0
        %1142 = vmatpush1.bf16.msra.mxu0 0
        %1143 = vmatprep.subr.bf16.mxu0 0
        %1144 = vmatpush1.bf16.msra.mxu0 0
        %1145 = vmatprep.subr.bf16.mxu0 0
        %1146 = vmatpush1.bf16.msra.mxu0 0
        %1147 = vmatprep.subr.bf16.mxu0 0
        %1148 = vmatpush1.bf16.msra.mxu0 0
        %1149 = vmatprep.subr.bf16.mxu0 0
        %1150 = vmatpush1.bf16.msra.mxu0 0
        %1151 = vmatprep.subr.bf16.mxu0 0
        %1152 = vmatpush1.bf16.msra.mxu0 0
        %1153 = vmatprep.subr.bf16.mxu0 0
        %1154 = vmatpush1.bf16.msra.mxu0 0
        %1155 = vmatprep.subr.bf16.mxu0 0
        %1156 = vmatpush1.bf16.msra.mxu0 0
        %1157 = vmatprep.subr.bf16.mxu0 0
        %1158 = vmatpush1.bf16.msra.mxu0 0
        %1159 = vmatprep.subr.bf16.mxu0 0
        %1160 = vmatpush1.bf16.msra.mxu0 0
        %1161 = vmatprep.subr.bf16.mxu0 0
        %1162 = vmatpush1.bf16.msra.mxu0 0
        %1163 = vmatprep.mubr.bf16.mxu0 0
        %1164 = vmatmul.mubr.bf16.gmra.mrb[0].mxu0 %v1123
        %v1165 = vpop.f32.mrb[0].mxu0
        %v1166 = vadd.f32 0.0, %v1165
        %v1167 = vpop.f32.mrb[0].mxu0
        %v1168 = vpop.f32.mrb[0].mxu0
        %v1169 = vadd.f32 0.0, %v1168
        %v1170 = vpop.f32.mrb[0].mxu0
        %1171 = vmatprep.mubr.bf16.mxu0 0
        %1172 = vmatmul.mubr.bf16.gmra.mrb[0].mxu0 %v1126
        %v1173 = vpop.f32.mrb[0].mxu0
        %v1174 = vadd.f32 0.0, %v1173
        %v1175 = vpop.f32.mrb[0].mxu0
        %v1176 = vpop.f32.mrb[0].mxu0
        %v1177 = vadd.f32 0.0, %v1176
        %v1178 = vpop.f32.mrb[0].mxu0
        %1179 = vdwg.mxu0
        %v1181 = vsel %vm525, %v1115, 0
        %v1184 = vsel %vm525, %v1116, 0
        %v1187 = vsel %vm535, %v1117, 0
        %1189 = vmatprep.subr.bf16.mxu0 0
        %1190 = vmatpush1.bf16.msra.mxu0 %v1187
        %1191 = vmatprep.subr.bf16.mxu0 0
        %1192 = vmatpush1.bf16.msra.mxu0 0
        %1193 = vmatprep.subr.bf16.mxu0 0
        %1194 = vmatpush1.bf16.msra.mxu0 0
        %1195 = vmatprep.subr.bf16.mxu0 0
        %1196 = vmatpush1.bf16.msra.mxu0 0
        %1197 = vmatprep.subr.bf16.mxu0 0
        %1198 = vmatpush1.bf16.msra.mxu0 0
        %1199 = vmatprep.subr.bf16.mxu0 0
        %1200 = vmatpush1.bf16.msra.mxu0 0
        %1201 = vmatprep.subr.bf16.mxu0 0
        %1202 = vmatpush1.bf16.msra.mxu0 0
        %1203 = vmatprep.subr.bf16.mxu0 0
        %1204 = vmatpush1.bf16.msra.mxu0 0
        %1205 = vmatprep.subr.bf16.mxu0 0
        %1206 = vmatpush1.bf16.msra.mxu0 0
        %1207 = vmatprep.subr.bf16.mxu0 0
        %1208 = vmatpush1.bf16.msra.mxu0 0
        %1209 = vmatprep.subr.bf16.mxu0 0
        %1210 = vmatpush1.bf16.msra.mxu0 0
        %1211 = vmatprep.subr.bf16.mxu0 0
        %1212 = vmatpush1.bf16.msra.mxu0 0
        %1213 = vmatprep.subr.bf16.mxu0 0
        %1214 = vmatpush1.bf16.msra.mxu0 0
        %1215 = vmatprep.subr.bf16.mxu0 0
        %1216 = vmatpush1.bf16.msra.mxu0 0
        %1217 = vmatprep.subr.bf16.mxu0 0
        %1218 = vmatpush1.bf16.msra.mxu0 0
        %1219 = vmatprep.subr.bf16.mxu0 0
        %1220 = vmatpush1.bf16.msra.mxu0 0
        %1221 = vmatprep.mubr.bf16.mxu0 0
        %1222 = vmatmul.mubr.bf16.gmra.mrb[0].mxu0 %v1181
        %v1223 = vpop.f32.mrb[0].mxu0
        %v1224 = vadd.f32 %v1166, %v1223
        %v1225 = vpop.f32.mrb[0].mxu0
        %v1226 = vpop.f32.mrb[0].mxu0
        %v1227 = vadd.f32 %v1169, %v1226
        %v1228 = vpop.f32.mrb[0].mxu0
        %1229 = vmatprep.mubr.bf16.mxu0 0
        %1230 = vmatmul.mubr.bf16.gmra.mrb[0].mxu0 %v1184
        %v1231 = vpop.f32.mrb[0].mxu0
        %v1232 = vadd.f32 %v1174, %v1231
        %v1233 = vpop.f32.mrb[0].mxu0
        %v1234 = vpop.f32.mrb[0].mxu0
        %v1235 = vadd.f32 %v1177, %v1234
        %v1236 = vpop.f32.mrb[0].mxu0
        %1237 = vdwg.mxu0
        %v1238 = vld [vmem:[#allocation2] sm:$0xff]
        %v1239 = vld [vmem:[#allocation2 + $0x8] sm:$0xff]
        %v1240 = vld [vmem:[#allocation2 + $0x10] sm:$0x1]
        %s1241 = scalar_lea.vmem [#allocation11], 4
        %v1242 = vld [vmem:[%s1241] sm:$0x3]
        %vm1243 = vsmask.f32 7424
        %v1245 = vshrl.u32 %v1238, 16
        %v1247 = vshll.u32 %v1238, 16
        %v1249 = vrot.slane %v1247, 1
        %v1250 = vor.u32 %v1245, %v1249
        %v1252 = vshll.u32 %v1239, 16
        %v1254 = vrot.slane %v1252, 1
        %v1255 = vsel %vm1243, %v1250, %v1254
        %v1256 = vshrl.u32 %v1239, 16
        %v1258 = vor.u32 %v1256, %v1254
        %v1260 = vshll.u32 %v1240, 16
        %v1262 = vrot.slane %v1260, 1
        %v1263 = vsel %vm1243, %v1258, %v1262
        %v1265 = vsel %vm525, %v1255, 0
        %v1268 = vsel %vm525, %v1263, 0
        %v1271 = vsel %vm535, %v1242, 0
        %1273 = vmatprep.subr.bf16.mxu0 0
        %1274 = vmatpush1.bf16.msra.mxu0 %v1271
        %1275 = vmatprep.subr.bf16.mxu0 0
        %1276 = vmatpush1.bf16.msra.mxu0 0
        %1277 = vmatprep.subr.bf16.mxu0 0
        %1278 = vmatpush1.bf16.msra.mxu0 0
        %1279 = vmatprep.subr.bf16.mxu0 0
        %1280 = vmatpush1.bf16.msra.mxu0 0
        %1281 = vmatprep.subr.bf16.mxu0 0
        %1282 = vmatpush1.bf16.msra.mxu0 0
        %1283 = vmatprep.subr.bf16.mxu0 0
        %1284 = vmatpush1.bf16.msra.mxu0 0
        %1285 = vmatprep.subr.bf16.mxu0 0
        %1286 = vmatpush1.bf16.msra.mxu0 0
        %1287 = vmatprep.subr.bf16.mxu0 0
        %1288 = vmatpush1.bf16.msra.mxu0 0
        %1289 = vmatprep.subr.bf16.mxu0 0
        %1290 = vmatpush1.bf16.msra.mxu0 0
        %1291 = vmatprep.subr.bf16.mxu0 0
        %1292 = vmatpush1.bf16.msra.mxu0 0
        %1293 = vmatprep.subr.bf16.mxu0 0
        %1294 = vmatpush1.bf16.msra.mxu0 0
        %1295 = vmatprep.subr.bf16.mxu0 0
        %1296 = vmatpush1.bf16.msra.mxu0 0
        %1297 = vmatprep.subr.bf16.mxu0 0
        %1298 = vmatpush1.bf16.msra.mxu0 0
        %1299 = vmatprep.subr.bf16.mxu0 0
        %1300 = vmatpush1.bf16.msra.mxu0 0
        %1301 = vmatprep.subr.bf16.mxu0 0
        %1302 = vmatpush1.bf16.msra.mxu0 0
        %1303 = vmatprep.subr.bf16.mxu0 0
        %1304 = vmatpush1.bf16.msra.mxu0 0
        %1305 = vmatprep.mubr.bf16.mxu0 0
        %1306 = vmatmul.mubr.bf16.gmra.mrb[0].mxu0 %v1265
        %v1307 = vpop.f32.mrb[0].mxu0
        %v1308 = vadd.f32 0.0, %v1307
        %v1309 = vpop.f32.mrb[0].mxu0
        %v1310 = vpop.f32.mrb[0].mxu0
        %v1311 = vadd.f32 0.0, %v1310
        %v1312 = vpop.f32.mrb[0].mxu0
        %1313 = vmatprep.mubr.bf16.mxu0 0
        %1314 = vmatmul.mubr.bf16.gmra.mrb[0].mxu0 %v1268
        %v1315 = vpop.f32.mrb[0].mxu0
        %v1316 = vadd.f32 0.0, %v1315
        %v1317 = vpop.f32.mrb[0].mxu0
        %v1318 = vpop.f32.mrb[0].mxu0
        %v1319 = vadd.f32 0.0, %v1318
        %v1320 = vpop.f32.mrb[0].mxu0
        %1321 = vdwg.mxu0
        %v1322 = vadd.f32 %v1224, %v1308
        %v1323 = vadd.f32 %v1227, %v1311
        %v1324 = vadd.f32 %v1232, %v1316
        %v1325 = vadd.f32 %v1235, %v1319
        %v1326 = vld [vmem:[%s956] sm:$0xff]
        %v1327 = vld [vmem:[%s956 + $0x8] sm:$0xff]
        %s1328 = scalar_lea.vmem [#allocation11], 6
        %v1329 = vld [vmem:[%s1328] sm:$0x3]
        %v1331 = vsel %vm525, %v1326, 0
        %v1334 = vsel %vm525, %v1327, 0
        %v1337 = vsel %vm535, %v1329, 0
        %1339 = vmatprep.subr.bf16.mxu0 0
        %1340 = vmatpush1.bf16.msra.mxu0 %v1337
        %1341 = vmatprep.subr.bf16.mxu0 0
        %1342 = vmatpush1.bf16.msra.mxu0 0
        %1343 = vmatprep.subr.bf16.mxu0 0
        %1344 = vmatpush1.bf16.msra.mxu0 0
        %1345 = vmatprep.subr.bf16.mxu0 0
        %1346 = vmatpush1.bf16.msra.mxu0 0
        %1347 = vmatprep.subr.bf16.mxu0 0
        %1348 = vmatpush1.bf16.msra.mxu0 0
        %1349 = vmatprep.subr.bf16.mxu0 0
        %1350 = vmatpush1.bf16.msra.mxu0 0
        %1351 = vmatprep.subr.bf16.mxu0 0
        %1352 = vmatpush1.bf16.msra.mxu0 0
        %1353 = vmatprep.subr.bf16.mxu0 0
        %1354 = vmatpush1.bf16.msra.mxu0 0
        %1355 = vmatprep.subr.bf16.mxu0 0
        %1356 = vmatpush1.bf16.msra.mxu0 0
        %1357 = vmatprep.subr.bf16.mxu0 0
        %1358 = vmatpush1.bf16.msra.mxu0 0
        %1359 = vmatprep.subr.bf16.mxu0 0
        %1360 = vmatpush1.bf16.msra.mxu0 0
        %1361 = vmatprep.subr.bf16.mxu0 0
        %1362 = vmatpush1.bf16.msra.mxu0 0
        %1363 = vmatprep.subr.bf16.mxu0 0
        %1364 = vmatpush1.bf16.msra.mxu0 0
        %1365 = vmatprep.subr.bf16.mxu0 0
        %1366 = vmatpush1.bf16.msra.mxu0 0
        %1367 = vmatprep.subr.bf16.mxu0 0
        %1368 = vmatpush1.bf16.msra.mxu0 0
        %1369 = vmatprep.subr.bf16.mxu0 0
        %1370 = vmatpush1.bf16.msra.mxu0 0
        %1371 = vmatprep.mubr.bf16.mxu0 0
        %1372 = vmatmul.mubr.bf16.gmra.mrb[0].mxu0 %v1331
        %v1373 = vpop.f32.mrb[0].mxu0
        %v1374 = vadd.f32 0.0, %v1373
        %v1375 = vpop.f32.mrb[0].mxu0
        %v1376 = vpop.f32.mrb[0].mxu0
        %v1377 = vadd.f32 0.0, %v1376
        %v1378 = vpop.f32.mrb[0].mxu0
        %1379 = vmatprep.mubr.bf16.mxu0 0
        %1380 = vmatmul.mubr.bf16.gmra.mrb[0].mxu0 %v1334
        %v1381 = vpop.f32.mrb[0].mxu0
        %v1382 = vadd.f32 0.0, %v1381
        %v1383 = vpop.f32.mrb[0].mxu0
        %v1384 = vpop.f32.mrb[0].mxu0
        %v1385 = vadd.f32 0.0, %v1384
        %v1386 = vpop.f32.mrb[0].mxu0
        %1387 = vdwg.mxu0
        %v1388 = vadd.f32 %v1322, %v1374
        %v1389 = vadd.f32 %v1323, %v1377
        %v1390 = vadd.f32 %v1324, %v1382
        %v1391 = vadd.f32 %v1325, %v1385
        %v1392 = vld [vmem:[%s1111] sm:$0xff]
        %v1393 = vld [vmem:[%s1111 + $0x8] sm:$0xff]
        %s1394 = scalar_lea.vmem [#allocation11], 8
        %v1395 = vld [vmem:[%s1394] sm:$0x3]
        %v1397 = vsel %vm525, %v1392, 0
        %v1400 = vsel %vm525, %v1393, 0
        %v1403 = vsel %vm535, %v1395, 0
        %1405 = vmatprep.subr.bf16.mxu0 0
        %1406 = vmatpush1.bf16.msra.mxu0 %v1403
        %1407 = vmatprep.subr.bf16.mxu0 0
        %1408 = vmatpush1.bf16.msra.mxu0 0
        %1409 = vmatprep.subr.bf16.mxu0 0
        %1410 = vmatpush1.bf16.msra.mxu0 0
        %1411 = vmatprep.subr.bf16.mxu0 0
        %1412 = vmatpush1.bf16.msra.mxu0 0
        %1413 = vmatprep.subr.bf16.mxu0 0
        %1414 = vmatpush1.bf16.msra.mxu0 0
        %1415 = vmatprep.subr.bf16.mxu0 0
        %1416 = vmatpush1.bf16.msra.mxu0 0
        %1417 = vmatprep.subr.bf16.mxu0 0
        %1418 = vmatpush1.bf16.msra.mxu0 0
        %1419 = vmatprep.subr.bf16.mxu0 0
        %1420 = vmatpush1.bf16.msra.mxu0 0
        %1421 = vmatprep.subr.bf16.mxu0 0
        %1422 = vmatpush1.bf16.msra.mxu0 0
        %1423 = vmatprep.subr.bf16.mxu0 0
        %1424 = vmatpush1.bf16.msra.mxu0 0
        %1425 = vmatprep.subr.bf16.mxu0 0
        %1426 = vmatpush1.bf16.msra.mxu0 0
        %1427 = vmatprep.subr.bf16.mxu0 0
        %1428 = vmatpush1.bf16.msra.mxu0 0
        %1429 = vmatprep.subr.bf16.mxu0 0
        %1430 = vmatpush1.bf16.msra.mxu0 0
        %1431 = vmatprep.subr.bf16.mxu0 0
        %1432 = vmatpush1.bf16.msra.mxu0 0
        %1433 = vmatprep.subr.bf16.mxu0 0
        %1434 = vmatpush1.bf16.msra.mxu0 0
        %1435 = vmatprep.subr.bf16.mxu0 0
        %1436 = vmatpush1.bf16.msra.mxu0 0
        %1437 = vmatprep.mubr.bf16.mxu0 0
        %1438 = vmatmul.mubr.bf16.gmra.mrb[0].mxu0 %v1397
        %v1439 = vpop.f32.mrb[0].mxu0
        %v1440 = vadd.f32 0.0, %v1439
        %v1441 = vpop.f32.mrb[0].mxu0
        %v1442 = vpop.f32.mrb[0].mxu0
        %v1443 = vadd.f32 0.0, %v1442
        %v1444 = vpop.f32.mrb[0].mxu0
        %1445 = vmatprep.mubr.bf16.mxu0 0
        %1446 = vmatmul.mubr.bf16.gmra.mrb[0].mxu0 %v1400
        %v1447 = vpop.f32.mrb[0].mxu0
        %v1448 = vadd.f32 0.0, %v1447
        %v1449 = vpop.f32.mrb[0].mxu0
        %v1450 = vpop.f32.mrb[0].mxu0
        %v1451 = vadd.f32 0.0, %v1450
        %v1452 = vpop.f32.mrb[0].mxu0
        %1453 = vdwg.mxu0
        %v1454 = vadd.f32 %v1388, %v1440
        %v1455 = vadd.f32 %v1389, %v1443
        %v1456 = vadd.f32 %v1390, %v1448
        %v1457 = vadd.f32 %v1391, %v1451
        %v1458 = vld [vmem:[%s956] sm:$0xff]
        %v1459 = vld [vmem:[%s956 + $0x8] sm:$0xff]
        %v1460 = vld [vmem:[%s956 + $0x10] sm:$0x1]
        %s1461 = scalar_lea.vmem [#allocation11], 10
        %v1462 = vld [vmem:[%s1461] sm:$0x3]
        %v1464 = vshrl.u32 %v1458, 16
        %v1466 = vshll.u32 %v1458, 16
        %v1468 = vrot.slane %v1466, 1
        %v1469 = vor.u32 %v1464, %v1468
        %v1471 = vshll.u32 %v1459, 16
        %v1473 = vrot.slane %v1471, 1
        %v1474 = vsel %vm1243, %v1469, %v1473
        %v1475 = vshrl.u32 %v1459, 16
        %v1477 = vor.u32 %v1475, %v1473
        %v1479 = vshll.u32 %v1460, 16
        %v1481 = vrot.slane %v1479, 1
        %v1482 = vsel %vm1243, %v1477, %v1481
        %v1484 = vsel %vm525, %v1474, 0
        %v1487 = vsel %vm525, %v1482, 0
        %v1490 = vsel %vm535, %v1462, 0
        %1492 = vmatprep.subr.bf16.mxu0 0
        %1493 = vmatpush1.bf16.msra.mxu0 %v1490
        %1494 = vmatprep.subr.bf16.mxu0 0
        %1495 = vmatpush1.bf16.msra.mxu0 0
        %1496 = vmatprep.subr.bf16.mxu0 0
        %1497 = vmatpush1.bf16.msra.mxu0 0
        %1498 = vmatprep.subr.bf16.mxu0 0
        %1499 = vmatpush1.bf16.msra.mxu0 0
        %1500 = vmatprep.subr.bf16.mxu0 0
        %1501 = vmatpush1.bf16.msra.mxu0 0
        %1502 = vmatprep.subr.bf16.mxu0 0
        %1503 = vmatpush1.bf16.msra.mxu0 0
        %1504 = vmatprep.subr.bf16.mxu0 0
        %1505 = vmatpush1.bf16.msra.mxu0 0
        %1506 = vmatprep.subr.bf16.mxu0 0
        %1507 = vmatpush1.bf16.msra.mxu0 0
        %1508 = vmatprep.subr.bf16.mxu0 0
        %1509 = vmatpush1.bf16.msra.mxu0 0
        %1510 = vmatprep.subr.bf16.mxu0 0
        %1511 = vmatpush1.bf16.msra.mxu0 0
        %1512 = vmatprep.subr.bf16.mxu0 0
        %1513 = vmatpush1.bf16.msra.mxu0 0
        %1514 = vmatprep.subr.bf16.mxu0 0
        %1515 = vmatpush1.bf16.msra.mxu0 0
        %1516 = vmatprep.subr.bf16.mxu0 0
        %1517 = vmatpush1.bf16.msra.mxu0 0
        %1518 = vmatprep.subr.bf16.mxu0 0
        %1519 = vmatpush1.bf16.msra.mxu0 0
        %1520 = vmatprep.subr.bf16.mxu0 0
        %1521 = vmatpush1.bf16.msra.mxu0 0
        %1522 = vmatprep.subr.bf16.mxu0 0
        %1523 = vmatpush1.bf16.msra.mxu0 0
        %1524 = vmatprep.mubr.bf16.mxu0 0
        %1525 = vmatmul.mubr.bf16.gmra.mrb[0].mxu0 %v1484
        %v1526 = vpop.f32.mrb[0].mxu0
        %v1527 = vadd.f32 0.0, %v1526
        %v1528 = vpop.f32.mrb[0].mxu0
        %v1529 = vpop.f32.mrb[0].mxu0
        %v1530 = vadd.f32 0.0, %v1529
        %v1531 = vpop.f32.mrb[0].mxu0
        %1532 = vmatprep.mubr.bf16.mxu0 0
        %1533 = vmatmul.mubr.bf16.gmra.mrb[0].mxu0 %v1487
        %v1534 = vpop.f32.mrb[0].mxu0
        %v1535 = vadd.f32 0.0, %v1534
        %v1536 = vpop.f32.mrb[0].mxu0
        %v1537 = vpop.f32.mrb[0].mxu0
        %v1538 = vadd.f32 0.0, %v1537
        %v1539 = vpop.f32.mrb[0].mxu0
        %1540 = vdwg.mxu0
        %v1541 = vadd.f32 %v1454, %v1527
        %v1542 = vadd.f32 %v1455, %v1530
        %v1543 = vadd.f32 %v1456, %v1535
        %v1544 = vadd.f32 %v1457, %v1538
        %v1545 = vld [vmem:[#allocation2] sm:$0xf0]
        %v1546 = vld [vmem:[#allocation2 + $0x10] sm:$0xf]
        %s1547 = scalar_lea.vmem [#allocation11], 12
        %v1548 = vld [vmem:[%s1547] sm:$0x3]
        %vm1552 = vcmask 1043456
        %v1553 = vrot.slane %v1545, 4
        %v1554 = vrot.slane %v1239, 4
        %v1555 = vsel %vm1552, %v1553, %v1554
        %v1556 = vrot.slane %v1546, 4
        %v1557 = vsel %vm1552, %v1554, %v1556
        %v1559 = vsel %vm525, %v1555, 0
        %v1562 = vsel %vm525, %v1557, 0
        %v1565 = vsel %vm535, %v1548, 0
        %1567 = vmatprep.subr.bf16.mxu0 0
        %1568 = vmatpush1.bf16.msra.mxu0 %v1565
        %1569 = vmatprep.subr.bf16.mxu0 0
        %1570 = vmatpush1.bf16.msra.mxu0 0
        %1571 = vmatprep.subr.bf16.mxu0 0
        %1572 = vmatpush1.bf16.msra.mxu0 0
        %1573 = vmatprep.subr.bf16.mxu0 0
        %1574 = vmatpush1.bf16.msra.mxu0 0
        %1575 = vmatprep.subr.bf16.mxu0 0
        %1576 = vmatpush1.bf16.msra.mxu0 0
        %1577 = vmatprep.subr.bf16.mxu0 0
        %1578 = vmatpush1.bf16.msra.mxu0 0
        %1579 = vmatprep.subr.bf16.mxu0 0
        %1580 = vmatpush1.bf16.msra.mxu0 0
        %1581 = vmatprep.subr.bf16.mxu0 0
        %1582 = vmatpush1.bf16.msra.mxu0 0
        %1583 = vmatprep.subr.bf16.mxu0 0
        %1584 = vmatpush1.bf16.msra.mxu0 0
        %1585 = vmatprep.subr.bf16.mxu0 0
        %1586 = vmatpush1.bf16.msra.mxu0 0
        %1587 = vmatprep.subr.bf16.mxu0 0
        %1588 = vmatpush1.bf16.msra.mxu0 0
        %1589 = vmatprep.subr.bf16.mxu0 0
        %1590 = vmatpush1.bf16.msra.mxu0 0
        %1591 = vmatprep.subr.bf16.mxu0 0
        %1592 = vmatpush1.bf16.msra.mxu0 0
        %1593 = vmatprep.subr.bf16.mxu0 0
        %1594 = vmatpush1.bf16.msra.mxu0 0
        %1595 = vmatprep.subr.bf16.mxu0 0
        %1596 = vmatpush1.bf16.msra.mxu0 0
        %1597 = vmatprep.subr.bf16.mxu0 0
        %1598 = vmatpush1.bf16.msra.mxu0 0
        %1599 = vmatprep.mubr.bf16.mxu0 0
        %1600 = vmatmul.mubr.bf16.gmra.mrb[0].mxu0 %v1559
        %v1601 = vpop.f32.mrb[0].mxu0
        %v1602 = vadd.f32 0.0, %v1601
        %v1603 = vpop.f32.mrb[0].mxu0
        %v1604 = vpop.f32.mrb[0].mxu0
        %v1605 = vadd.f32 0.0, %v1604
        %v1606 = vpop.f32.mrb[0].mxu0
        %1607 = vmatprep.mubr.bf16.mxu0 0
        %1608 = vmatmul.mubr.bf16.gmra.mrb[0].mxu0 %v1562
        %v1609 = vpop.f32.mrb[0].mxu0
        %v1610 = vadd.f32 0.0, %v1609
        %v1611 = vpop.f32.mrb[0].mxu0
        %v1612 = vpop.f32.mrb[0].mxu0
        %v1613 = vadd.f32 0.0, %v1612
        %v1614 = vpop.f32.mrb[0].mxu0
        %1615 = vdwg.mxu0
        %v1616 = vadd.f32 %v1541, %v1602
        %v1617 = vadd.f32 %v1542, %v1605
        %v1618 = vadd.f32 %v1543, %v1610
        %v1619 = vadd.f32 %v1544, %v1613
        %v1620 = vld [vmem:[%s801] sm:$0xf0]
        %v1621 = vld [vmem:[%s801 + $0x8] sm:$0xff]
        %v1622 = vld [vmem:[%s801 + $0x10] sm:$0xf]
        %s1623 = scalar_lea.vmem [#allocation11], 14
        %v1624 = vld [vmem:[%s1623] sm:$0x3]
        %v1628 = vrot.slane %v1620, 4
        %v1629 = vrot.slane %v1621, 4
        %v1630 = vsel %vm1552, %v1628, %v1629
        %v1631 = vrot.slane %v1622, 4
        %v1632 = vsel %vm1552, %v1629, %v1631
        %v1634 = vsel %vm525, %v1630, 0
        %v1637 = vsel %vm525, %v1632, 0
        %v1640 = vsel %vm535, %v1624, 0
        %1642 = vmatprep.subr.bf16.mxu0 0
        %1643 = vmatpush1.bf16.msra.mxu0 %v1640
        %1644 = vmatprep.subr.bf16.mxu0 0
        %1645 = vmatpush1.bf16.msra.mxu0 0
        %1646 = vmatprep.subr.bf16.mxu0 0
        %1647 = vmatpush1.bf16.msra.mxu0 0
        %1648 = vmatprep.subr.bf16.mxu0 0
        %1649 = vmatpush1.bf16.msra.mxu0 0
        %1650 = vmatprep.subr.bf16.mxu0 0
        %1651 = vmatpush1.bf16.msra.mxu0 0
        %1652 = vmatprep.subr.bf16.mxu0 0
        %1653 = vmatpush1.bf16.msra.mxu0 0
        %1654 = vmatprep.subr.bf16.mxu0 0
        %1655 = vmatpush1.bf16.msra.mxu0 0
        %1656 = vmatprep.subr.bf16.mxu0 0
        %1657 = vmatpush1.bf16.msra.mxu0 0
        %1658 = vmatprep.subr.bf16.mxu0 0
        %1659 = vmatpush1.bf16.msra.mxu0 0
        %1660 = vmatprep.subr.bf16.mxu0 0
        %1661 = vmatpush1.bf16.msra.mxu0 0
        %1662 = vmatprep.subr.bf16.mxu0 0
        %1663 = vmatpush1.bf16.msra.mxu0 0
        %1664 = vmatprep.subr.bf16.mxu0 0
        %1665 = vmatpush1.bf16.msra.mxu0 0
        %1666 = vmatprep.subr.bf16.mxu0 0
        %1667 = vmatpush1.bf16.msra.mxu0 0
        %1668 = vmatprep.subr.bf16.mxu0 0
        %1669 = vmatpush1.bf16.msra.mxu0 0
        %1670 = vmatprep.subr.bf16.mxu0 0
        %1671 = vmatpush1.bf16.msra.mxu0 0
        %1672 = vmatprep.subr.bf16.mxu0 0
        %1673 = vmatpush1.bf16.msra.mxu0 0
        %1674 = vmatprep.mubr.bf16.mxu0 0
        %1675 = vmatmul.mubr.bf16.gmra.mrb[0].mxu0 %v1634
        %v1676 = vpop.f32.mrb[0].mxu0
        %v1677 = vadd.f32 0.0, %v1676
        %v1678 = vpop.f32.mrb[0].mxu0
        %v1679 = vpop.f32.mrb[0].mxu0
        %v1680 = vadd.f32 0.0, %v1679
        %v1681 = vpop.f32.mrb[0].mxu0
        %1682 = vmatprep.mubr.bf16.mxu0 0
        %1683 = vmatmul.mubr.bf16.gmra.mrb[0].mxu0 %v1637
        %v1684 = vpop.f32.mrb[0].mxu0
        %v1685 = vadd.f32 0.0, %v1684
        %v1686 = vpop.f32.mrb[0].mxu0
        %v1687 = vpop.f32.mrb[0].mxu0
        %v1688 = vadd.f32 0.0, %v1687
        %v1689 = vpop.f32.mrb[0].mxu0
        %1690 = vdwg.mxu0
        %v1691 = vadd.f32 %v1616, %v1677
        %v1692 = vadd.f32 %v1617, %v1680
        %v1693 = vadd.f32 %v1618, %v1685
        %v1694 = vadd.f32 %v1619, %v1688
        %v1695 = vld [vmem:[#allocation2 + $0x10] sm:$0x1f]
        %s1696 = scalar_lea.vmem [#allocation11], 16
        %v1697 = vld [vmem:[%s1696] sm:$0x3]
        %vm1698 = vsmask.f32 3328
        %v1700 = vshrl.u32 %v1545, 16
        %v1702 = vrot.slane %v1700, 4
        %v1703 = vshll.u32 %v1545, 16
        %v1705 = vrot.slane %v1703, 5
        %v1706 = vor.u32 %v1702, %v1705
        %v1707 = vrot.slane %v1256, 4
        %v1708 = vrot.slane %v1252, 5
        %v1709 = vor.u32 %v1707, %v1708
        %v1710 = vsel %vm1698, %v1706, %v1709
        %v1712 = vshrl.u32 %v1695, 16
        %v1714 = vrot.slane %v1712, 4
        %v1715 = vshll.u32 %v1695, 16
        %v1717 = vrot.slane %v1715, 5
        %v1718 = vor.u32 %v1714, %v1717
        %v1719 = vsel %vm1698, %v1709, %v1718
        %v1721 = vsel %vm525, %v1710, 0
        %v1724 = vsel %vm525, %v1719, 0
        %v1727 = vsel %vm535, %v1697, 0
        %1729 = vmatprep.subr.bf16.mxu0 0
        %1730 = vmatpush1.bf16.msra.mxu0 %v1727
        %1731 = vmatprep.subr.bf16.mxu0 0
        %1732 = vmatpush1.bf16.msra.mxu0 0
        %1733 = vmatprep.subr.bf16.mxu0 0
        %1734 = vmatpush1.bf16.msra.mxu0 0
        %1735 = vmatprep.subr.bf16.mxu0 0
        %1736 = vmatpush1.bf16.msra.mxu0 0
        %1737 = vmatprep.subr.bf16.mxu0 0
        %1738 = vmatpush1.bf16.msra.mxu0 0
        %1739 = vmatprep.subr.bf16.mxu0 0
        %1740 = vmatpush1.bf16.msra.mxu0 0
        %1741 = vmatprep.subr.bf16.mxu0 0
        %1742 = vmatpush1.bf16.msra.mxu0 0
        %1743 = vmatprep.subr.bf16.mxu0 0
        %1744 = vmatpush1.bf16.msra.mxu0 0
        %1745 = vmatprep.subr.bf16.mxu0 0
        %1746 = vmatpush1.bf16.msra.mxu0 0
        %1747 = vmatprep.subr.bf16.mxu0 0
        %1748 = vmatpush1.bf16.msra.mxu0 0
        %1749 = vmatprep.subr.bf16.mxu0 0
        %1750 = vmatpush1.bf16.msra.mxu0 0
        %1751 = vmatprep.subr.bf16.mxu0 0
        %1752 = vmatpush1.bf16.msra.mxu0 0
        %1753 = vmatprep.subr.bf16.mxu0 0
        %1754 = vmatpush1.bf16.msra.mxu0 0
        %1755 = vmatprep.subr.bf16.mxu0 0
        %1756 = vmatpush1.bf16.msra.mxu0 0
        %1757 = vmatprep.subr.bf16.mxu0 0
        %1758 = vmatpush1.bf16.msra.mxu0 0
        %1759 = vmatprep.subr.bf16.mxu0 0
        %1760 = vmatpush1.bf16.msra.mxu0 0
        %1761 = vmatprep.mubr.bf16.mxu0 0
        %1762 = vmatmul.mubr.bf16.gmra.mrb[0].mxu0 %v1721
        %v1763 = vpop.f32.mrb[0].mxu0
        %v1764 = vadd.f32 0.0, %v1763
        %v1765 = vpop.f32.mrb[0].mxu0
        %v1766 = vpop.f32.mrb[0].mxu0
        %v1767 = vadd.f32 0.0, %v1766
        %v1768 = vpop.f32.mrb[0].mxu0
        %1769 = vmatprep.mubr.bf16.mxu0 0
        %1770 = vmatmul.mubr.bf16.gmra.mrb[0].mxu0 %v1724
        %v1771 = vpop.f32.mrb[0].mxu0
        %v1772 = vadd.f32 0.0, %v1771
        %v1773 = vpop.f32.mrb[0].mxu0
        %v1774 = vpop.f32.mrb[0].mxu0
        %v1775 = vadd.f32 0.0, %v1774
        %v1776 = vpop.f32.mrb[0].mxu0
        %1777 = vdwg.mxu0
        %v1778 = vadd.f32 %v1691, %v1764
        %v1779 = vadd.f32 %v1692, %v1767
        %v1780 = vadd.f32 %v1693, %v1772
        %v1781 = vadd.f32 %v1694, %v1775
        %v1782 = vld [vmem:[#allocation12] sm:$0x1]
        %v1784 = vlaneseq
        %v1785 = vshrl.u32 %v1784, 7
        %v1786 = vsub.s32 0, %v1785
        %v1787 = vrot.slane %v1782, %v1786
        %v1789 = vadd.f32 %v1778, %v1787
        %v1790 = vadd.f32 %v1779, %v1787
        %v1791 = vadd.f32 %v1780, %v1787
        %v1792 = vadd.f32 %v1781, %v1787
        %v1793 = vmax.f32 %v1789, 0.0
        %v1794 = vmax.f32 %v1790, 0.0
        %v1795 = vmax.f32 %v1791, 0.0
        %v1796 = vmax.f32 %v1792, 0.0
        %v1797 = vpack.c.bf16 %v1794, %v1793
        %v1798 = vpack.c.bf16 %v1796, %v1795
        %v1799 = vld [vmem:[#allocation14] sm:$0x3]
        %v1800 = vld [vmem:[#allocation15] sm:$0x1]
        %v1802 = vlaneseq
        %v1803 = vshrl.u32 %v1802, 7
        %v1804 = vsub.s32 0, %v1803
        %v1805 = vrot.slane %v1800, %v1804
        %v1808 = vsel %vm525, %v1797, 0
        %v1811 = vsel %vm525, %v1798, 0
        %v1814 = vsel %vm535, %v1799, 0
        %1816 = vmatprep.subr.bf16.mxu0 0
        %1817 = vmatpush1.bf16.msra.mxu0 %v1814
        %1818 = vmatprep.subr.bf16.mxu0 0
        %1819 = vmatpush1.bf16.msra.mxu0 0
        %1820 = vmatprep.subr.bf16.mxu0 0
        %1821 = vmatpush1.bf16.msra.mxu0 0
        %1822 = vmatprep.subr.bf16.mxu0 0
        %1823 = vmatpush1.bf16.msra.mxu0 0
        %1824 = vmatprep.subr.bf16.mxu0 0
        %1825 = vmatpush1.bf16.msra.mxu0 0
        %1826 = vmatprep.subr.bf16.mxu0 0
        %1827 = vmatpush1.bf16.msra.mxu0 0
        %1828 = vmatprep.subr.bf16.mxu0 0
        %1829 = vmatpush1.bf16.msra.mxu0 0
        %1830 = vmatprep.subr.bf16.mxu0 0
        %1831 = vmatpush1.bf16.msra.mxu0 0
        %1832 = vmatprep.subr.bf16.mxu0 0
        %1833 = vmatpush1.bf16.msra.mxu0 0
        %1834 = vmatprep.subr.bf16.mxu0 0
        %1835 = vmatpush1.bf16.msra.mxu0 0
        %1836 = vmatprep.subr.bf16.mxu0 0
        %1837 = vmatpush1.bf16.msra.mxu0 0
        %1838 = vmatprep.subr.bf16.mxu0 0
        %1839 = vmatpush1.bf16.msra.mxu0 0
        %1840 = vmatprep.subr.bf16.mxu0 0
        %1841 = vmatpush1.bf16.msra.mxu0 0
        %1842 = vmatprep.subr.bf16.mxu0 0
        %1843 = vmatpush1.bf16.msra.mxu0 0
        %1844 = vmatprep.subr.bf16.mxu0 0
        %1845 = vmatpush1.bf16.msra.mxu0 0
        %1846 = vmatprep.subr.bf16.mxu0 0
        %1847 = vmatpush1.bf16.msra.mxu0 0
        %1848 = vmatprep.mubr.bf16.mxu0 0
        %1849 = vmatmul.mubr.bf16.gmra.mrb[0].mxu0 %v1808
        %v1850 = vpop.f32.mrb[0].mxu0
        %v1851 = vadd.f32 %v1805, %v1850
        %v1852 = vpop.f32.mrb[0].mxu0
        %v1853 = vpop.f32.mrb[0].mxu0
        %v1854 = vadd.f32 %v1805, %v1853
        %v1855 = vpop.f32.mrb[0].mxu0
        %1856 = vmatprep.mubr.bf16.mxu0 0
        %1857 = vmatmul.mubr.bf16.gmra.mrb[0].mxu0 %v1811
        %v1858 = vpop.f32.mrb[0].mxu0
        %v1859 = vadd.f32 %v1805, %v1858
        %v1860 = vpop.f32.mrb[0].mxu0
        %v1861 = vpop.f32.mrb[0].mxu0
        %v1862 = vadd.f32 %v1805, %v1861
        %v1863 = vpop.f32.mrb[0].mxu0
        %1864 = vdwg.mxu0
        %v1865 = vld [vmem:[%s960] sm:$0xf]
        %v1866 = vld [vmem:[%s960 + $0x4] sm:$0xf]
        %v1867 = vld [vmem:[%s960 + $0x8] sm:$0xf]
        %v1868 = vld [vmem:[%s960 + $0xc] sm:$0xf]
        %v1869 = vld [vmem:[#allocation17] sm:$0x3]
        %v1870 = vld [vmem:[#allocation18] sm:$0x1]
        %v1872 = vlaneseq
        %v1873 = vshrl.u32 %v1872, 7
        %v1874 = vsub.s32 0, %v1873
        %v1875 = vrot.slane %v1870, %v1874
        %v1881 = vunpack.c.l.b16 %v1865
        %v1882 = vunpack.c.l.b16 %v1866
        %v1883 = vunpack.c.l.b16 %v1867
        %v1884 = vunpack.c.l.b16 %v1868
        %v1885 = vpack.c.b16 %v1882, %v1881
        %v1886 = vpack.c.b16 %v1884, %v1883
        %v1888 = vsel %vm525, %v1885, 0
        %v1891 = vsel %vm525, %v1886, 0
        %v1894 = vsel %vm535, %v1869, 0
        %1896 = vmatprep.subr.bf16.mxu0 0
        %1897 = vmatpush1.bf16.msra.mxu0 %v1894
        %1898 = vmatprep.subr.bf16.mxu0 0
        %1899 = vmatpush1.bf16.msra.mxu0 0
        %1900 = vmatprep.subr.bf16.mxu0 0
        %1901 = vmatpush1.bf16.msra.mxu0 0
        %1902 = vmatprep.subr.bf16.mxu0 0
        %1903 = vmatpush1.bf16.msra.mxu0 0
        %1904 = vmatprep.subr.bf16.mxu0 0
        %1905 = vmatpush1.bf16.msra.mxu0 0
        %1906 = vmatprep.subr.bf16.mxu0 0
        %1907 = vmatpush1.bf16.msra.mxu0 0
        %1908 = vmatprep.subr.bf16.mxu0 0
        %1909 = vmatpush1.bf16.msra.mxu0 0
        %1910 = vmatprep.subr.bf16.mxu0 0
        %1911 = vmatpush1.bf16.msra.mxu0 0
        %1912 = vmatprep.subr.bf16.mxu0 0
        %1913 = vmatpush1.bf16.msra.mxu0 0
        %1914 = vmatprep.subr.bf16.mxu0 0
        %1915 = vmatpush1.bf16.msra.mxu0 0
        %1916 = vmatprep.subr.bf16.mxu0 0
        %1917 = vmatpush1.bf16.msra.mxu0 0
        %1918 = vmatprep.subr.bf16.mxu0 0
        %1919 = vmatpush1.bf16.msra.mxu0 0
        %1920 = vmatprep.subr.bf16.mxu0 0
        %1921 = vmatpush1.bf16.msra.mxu0 0
        %1922 = vmatprep.subr.bf16.mxu0 0
        %1923 = vmatpush1.bf16.msra.mxu0 0
        %1924 = vmatprep.subr.bf16.mxu0 0
        %1925 = vmatpush1.bf16.msra.mxu0 0
        %1926 = vmatprep.subr.bf16.mxu0 0
        %1927 = vmatpush1.bf16.msra.mxu0 0
        %1928 = vmatprep.mubr.bf16.mxu0 0
        %1929 = vmatmul.mubr.bf16.gmra.mrb[0].mxu0 %v1888
        %v1930 = vpop.f32.mrb[0].mxu0
        %v1931 = vadd.f32 %v1875, %v1930
        %v1932 = vpop.f32.mrb[0].mxu0
        %v1933 = vpop.f32.mrb[0].mxu0
        %v1934 = vadd.f32 %v1875, %v1933
        %v1935 = vpop.f32.mrb[0].mxu0
        %1936 = vmatprep.mubr.bf16.mxu0 0
        %1937 = vmatmul.mubr.bf16.gmra.mrb[0].mxu0 %v1891
        %v1938 = vpop.f32.mrb[0].mxu0
        %v1939 = vadd.f32 %v1875, %v1938
        %v1940 = vpop.f32.mrb[0].mxu0
        %v1941 = vpop.f32.mrb[0].mxu0
        %v1942 = vadd.f32 %v1875, %v1941
        %v1943 = vpop.f32.mrb[0].mxu0
        %1944 = vdwg.mxu0
        %v1945 = vadd.f32 %v1851, %v1931
        %v1946 = vadd.f32 %v1854, %v1934
        %v1947 = vadd.f32 %v1859, %v1939
        %v1948 = vadd.f32 %v1862, %v1942
        %v1949 = vmax.f32 %v1945, 0.0
        %v1950 = vmax.f32 %v1946, 0.0
        %v1951 = vmax.f32 %v1947, 0.0
        %v1952 = vmax.f32 %v1948, 0.0
        %vm1953 = vcmask 125952
        %1954 = vst.msk [vmem:[%s494] sm:$0xf] %vm1953, %v1949
        %1955 = vst.msk [vmem:[%s494 + $0x4] sm:$0xf] %vm1953, %v1950
        %1956 = vst.msk [vmem:[%s494 + $0x8] sm:$0xf] %vm1953, %v1951
        %1957 = vst.msk [vmem:[%s494 + $0xc] sm:$0xf] %vm1953, %v1952
        %s1958 = sand.u32 %s255, 1
        %s1959 = scalar_lea.sflag [#allocation5], %s1958
        %s1960 = sand.u32 %s255, 1
        %s1961 = smul.addr %s1960, 16
        %s1962 = scalar_lea.vmem [#allocation20], %s1961
        // Predicated region
        $region101: #{bottleneck_forward.1} parent=59 // pred_check
          %p1963 = pneg %p265
        $region102: #{bottleneck_forward.1} parent=59 // pred_check_branch
          %1965 = sbr.rel (%p1963) target = $region104
        $region103: #{bottleneck_forward.1} parent=59 // pred_region
          %s1967 = ssub.s32 256, 256
          %1968 = vsyncadd %s1959, %s1967
          %s1969 = smul.addr %s32, 4
          %s1970 = smul.addr %s1969, 64
          %s1971 = scalar_lea.hbm %s10, %s1970
          %s1972 = sshll.u32 %s1962, 4
          %s1973 = int_to_ptr.vmem [resolvable:$true] %s1972
          %1978 = dma.vmem_to_hbm [thread:$0]  %s1973, 256, %s1971, %s1959, 64, 64, 4
        $region104: #{bottleneck_forward.1} parent=59 // pred_fallthru
          _
      $region60: #{bottleneck_forward.1} parent=5 // pred_fallthru
        _
      %p1979 = scmp.le.s32.totalorder 2, %s27
      // Predicated region
      $region105: #{bottleneck_forward.1} parent=5 // pred_check
        %p1980 = pneg %p1979
      $region106: #{bottleneck_forward.1} parent=5 // pred_check_branch
        %1982 = sbr.rel (%p1980) target = $region108
      $region107: #{bottleneck_forward.1} parent=5 // pred_region
        %s1983 = ssub.s32 %s27, 2
        // Predicated region
        $region109: #{bottleneck_forward.1} parent=107 // pred_check
          %p1984 = pneg %p271
        $region110: #{bottleneck_forward.1} parent=107 // pred_check_branch
          %1986 = sbr.rel (%p1984) target = $region112
        $region111: #{bottleneck_forward.1} parent=107 // pred_region
          %s1987 = sand.u32 %s256, 1
          %s1988 = scalar_lea.sflag [#allocation5], %s1987
          %s1989 = sand.u32 %s256, 1
          %s1990 = smul.addr %s1989, 16
          %s1991 = scalar_lea.vmem [#allocation20], %s1990
          %1992 = dma.done %s1988, 256
        $region112: #{bottleneck_forward.1} parent=107 // pred_fallthru
          _
      $region108: #{bottleneck_forward.1} parent=5 // pred_fallthru
        _
    $region6: #{bottleneck_forward.1} parent=1 // loop_footer
      %s31 = sadd.s32 1, %s27
    $region7: #{bottleneck_forward.1} parent=1 // loop_footer_branch
      %26 = sbr.rel target = $region3
    $region8: #{bottleneck_forward.1} parent=1 // loop_exit
      _
    %1993 = vsyncpa [#allocation4], 1
    %s1994 = scalar_lea.sflag [#allocation4], 1
    %1995 = vsyncpa %s1994, 1
    %1996 = vsyncpa [#allocation7], 1
    %1997 = vsyncpa [#allocation10], 1
    %1998 = vsyncpa [#allocation13], 1
    %1999 = vsyncpa [#allocation16], 1
    %2000 = vsyncpa [#allocation19], 1
    %2001 = vsyncpa [#allocation5], 1
    %s2002 = scalar_lea.sflag [#allocation5], 1
    %2003 = vsyncpa %s2002, 1

</llo_original>
